<compile_context>
chip_gen: v7x
topology: tpu7x:2x2x1
jax: 0.10.0
libtpu: 0.0.40
codegen_flags: <defaults>
</compile_context>

<pallas_src>
import functools
import math

import jax
import jax.numpy as jnp
from jax import lax
from jax.experimental import pallas as pl
from jax.experimental.pallas import tpu as pltpu


LN_EPS = 1e-5


# ----------------------------- in-kernel helpers -----------------------------

def _ln(x, g, b, eps=LN_EPS):
    mu = jnp.mean(x, axis=-1, keepdims=True)
    xc = x - mu
    var = jnp.mean(xc * xc, axis=-1, keepdims=True)
    return xc * lax.rsqrt(var + eps) * g + b


def _row_block(rows, cap=256):
    """Largest multiple of 8 that divides `rows` and is <= cap (else rows)."""
    cand = min(rows, cap)
    cand -= cand % 8
    while cand >= 8:
        if rows % cand == 0:
            return cand
        cand -= 8
    return rows


def _vmem_limit(block_bytes):
    # Double-buffered blocks + scheduler margin; clamp to a range that is
    # valid across v5e (128 MiB phys), v6e (128 MiB) and v7x (64 MiB).
    return int(min(max(2 * block_bytes + (8 << 20), 32 << 20), 64 << 20))


# ----------------------------- fused attention sublayer -----------------------------
# out = x + OutProj( MHA( LN(x), kv_src, kv_src, mask ) )
#   self_attn=True  : kv_src = LN(x)        (attn_1, trg_mask)
#   self_attn=False : kv_src = e_outputs    (attn_2, src_mask)  -- not layernormed

def _attn_sublayer_kernel(lang_ref, *refs, nhead, d_model, self_attn, eps):
    del lang_ref  # language selection already happened in the index_maps
    if self_attn:
        (x_ref, m_ref, g_ref, b_ref,
         wqkv_ref, bqkv_ref, wo_ref, bo_ref, o_ref) = refs
    else:
        (x_ref, kv_ref, m_ref, g_ref, b_ref,
         wqkv_ref, bqkv_ref, wo_ref, bo_ref, o_ref) = refs

    D = d_model
    dk = D // nhead
    scale = 1.0 / math.sqrt(dk)

    x = x_ref[...]                                          # (Tq, D) f32 residual
    x2 = _ln(x, g_ref[...], b_ref[...], eps).astype(jnp.bfloat16)

    if self_attn:
        qkv = jnp.dot(x2, wqkv_ref[...],                    # bf16 x bf16 -> f32 acc
                      preferred_element_type=jnp.float32) + bqkv_ref[...]
        q = qkv[:, 0 * D:1 * D] * scale                     # scale folded into q once
        k = qkv[:, 1 * D:2 * D]
        v = qkv[:, 2 * D:3 * D]
    else:
        kv_src = kv_ref[...]                                # (Tk, D) bf16 encoder output
        q = (jnp.dot(x2, wqkv_ref[:, :D],                   # slice the ref, not the value
                     preferred_element_type=jnp.float32) + bqkv_ref[:, :D]) * scale
        kv = (jnp.dot(kv_src, wqkv_ref[:, D:],
                      preferred_element_type=jnp.float32) + bqkv_ref[:, D:])
        k = kv[:, :D]
        v = kv[:, D:]

    qb = q.astype(jnp.bfloat16)
    kb = k.astype(jnp.bfloat16)
    vb = v.astype(jnp.bfloat16)
    madd = m_ref[...].astype(jnp.float32)                   # (Tq, Tk) additive mask

    # Per-head attention on lane slices; outputs are concatenated once and run
    # through a single full-K matmul with Wo.
    # TODO(synk): for nhead >= 8 switch this Python unroll to a bounded
    # lax.fori_loop(unroll=True) to keep vreg live ranges in check.
    heads = []
    for h in range(nhead):
        sl = slice(h * dk, (h + 1) * dk)
        s = lax.dot_general(qb[:, sl], kb[:, sl],           # contract last dims: no .T
                            (((1,), (1,)), ((), ())),
                            preferred_element_type=jnp.float32) + madd
        s_max = jnp.max(s, axis=-1, keepdims=True)
        p = jnp.exp(s - s_max)
        p = p * pl.reciprocal(jnp.sum(p, axis=-1, keepdims=True), approx=True)
        heads.append(jnp.dot(p.astype(jnp.bfloat16), vb[:, sl],
                             preferred_element_type=jnp.float32))

    concat = jnp.concatenate(heads, axis=-1).astype(jnp.bfloat16)   # (Tq, D)
    out = jnp.dot(concat, wo_ref[...], preferred_element_type=jnp.float32)
    o_ref[...] = x + out + bo_ref[...]                      # residual + out-proj bias


def attention_sublayer(x, kv_in, madd, lang_arr, ln_g, ln_b,
                       wqkv, bqkv, wo, bo, *, nhead, self_attn):
    B, T, D = x.shape
    Tk = kv_in.shape[1]
    kern = functools.partial(_attn_sublayer_kernel, nhead=nhead, d_model=D,
                             self_attn=self_attn, eps=LN_EPS)

    in_specs = [pl.BlockSpec((None, T, D), lambda b, lang: (b, 0, 0))]        # x (f32)
    operands = [x]
    if not self_attn:
        in_specs.append(pl.BlockSpec((None, Tk, D), lambda b, lang: (b, 0, 0)))  # enc kv (bf16)
        operands.append(kv_in)
    in_specs += [
        pl.BlockSpec((None, T, Tk), lambda b, lang: (b, 0, 0)),               # additive mask (bf16)
        pl.BlockSpec((1, D), lambda b, lang: (0, 0)),                         # ln gamma
        pl.BlockSpec((1, D), lambda b, lang: (0, 0)),                         # ln beta
        pl.BlockSpec((None, D, 3 * D), lambda b, lang: (lang[0], 0, 0)),      # Wqkv bank (bf16)
        pl.BlockSpec((None, 1, 3 * D), lambda b, lang: (lang[0], 0, 0)),      # bqkv bank
        pl.BlockSpec((None, D, D), lambda b, lang: (lang[0], 0, 0)),          # Wo bank (bf16)
        pl.BlockSpec((None, 1, D), lambda b, lang: (lang[0], 0, 0)),          # bo bank
    ]
    operands += [madd, ln_g, ln_b, wqkv, bqkv, wo, bo]

    block_bytes = (2 * T * D * 4                      # x in + out (f32)
                   + T * Tk * 2                       # mask (bf16)
                   + 2 * D * 4                        # ln params
                   + D * 3 * D * 2 + 3 * D * 4        # Wqkv + bqkv
                   + D * D * 2 + D * 4                # Wo + bo
                   + (0 if self_attn else Tk * D * 2))

    # TODO(synk): at production T, tile Tq/Tk with an online softmax (flash-style)
    # instead of one whole-sequence block per batch element.
    return pl.pallas_call(
        kern,
        out_shape=jax.ShapeDtypeStruct((B, T, D), jnp.float32),
        grid_spec=pltpu.PrefetchScalarGridSpec(
            num_scalar_prefetch=1,
            grid=(B,),
            in_specs=in_specs,
            out_specs=pl.BlockSpec((None, T, D), lambda b, lang: (b, 0, 0)),
        ),
        compiler_params=pltpu.CompilerParams(
            dimension_semantics=("parallel",),
            vmem_limit_bytes=_vmem_limit(block_bytes)),
    )(lang_arr, *operands)


# ----------------------------- fused FFN sublayer -----------------------------
# out = x + W2(relu(W1(LN(x)) + b1)) + b2 ; hidden stays on-chip.
# Works on the flattened (B*T, D) activation with a row-tiled grid.
# If final_ln=True (last decoder layer) the decoder's output LayerNorm is
# applied in the same kernel before the write-back.

def _ffn_sublayer_kernel(lang_ref, *refs, eps, final_ln):
    del lang_ref
    if final_ln:
        (x_ref, g_ref, b_ref, w1_ref, b1_ref, w2_ref, b2_ref,
         gf_ref, bf_ref, o_ref) = refs
    else:
        (x_ref, g_ref, b_ref, w1_ref, b1_ref, w2_ref, b2_ref, o_ref) = refs

    x = x_ref[...]                                            # (R, D) f32
    x2 = _ln(x, g_ref[...], b_ref[...], eps).astype(jnp.bfloat16)
    h = jnp.dot(x2, w1_ref[...], preferred_element_type=jnp.float32) + b1_ref[...]
    h = jnp.maximum(h, 0.0).astype(jnp.bfloat16)              # ReLU, (R, F) stays on-chip
    y = x + jnp.dot(h, w2_ref[...], preferred_element_type=jnp.float32) + b2_ref[...]
    if final_ln:
        y = _ln(y, gf_ref[...], bf_ref[...], eps)
    o_ref[...] = y


def ffn_sublayer(x_flat, lang_arr, ln_g, ln_b, w1, b1, w2, b2,
                 final_g=None, final_b=None):
    R, D = x_flat.shape
    F = w1.shape[-1]
    final_ln = final_g is not None
    rb = _row_block(R)
    kern = functools.partial(_ffn_sublayer_kernel, eps=LN_EPS, final_ln=final_ln)

    in_specs = [
        pl.BlockSpec((rb, D), lambda r, lang: (r, 0)),                        # x rows
        pl.BlockSpec((1, D), lambda r, lang: (0, 0)),                         # ln gamma
        pl.BlockSpec((1, D), lambda r, lang: (0, 0)),                         # ln beta
        pl.BlockSpec((None, D, F), lambda r, lang: (lang[0], 0, 0)),          # W1 bank (bf16)
        pl.BlockSpec((None, 1, F), lambda r, lang: (lang[0], 0, 0)),          # b1 bank
        pl.BlockSpec((None, F, D), lambda r, lang: (lang[0], 0, 0)),          # W2 bank (bf16)
        pl.BlockSpec((None, 1, D), lambda r, lang: (lang[0], 0, 0)),          # b2 bank
    ]
    operands = [x_flat, ln_g, ln_b, w1, b1, w2, b2]
    if final_ln:
        in_specs += [pl.BlockSpec((1, D), lambda r, lang: (0, 0)),            # final ln gamma
                     pl.BlockSpec((1, D), lambda r, lang: (0, 0))]            # final ln beta
        operands += [final_g, final_b]

    block_bytes = (2 * rb * D * 4            # x in + out (f32)
                   + rb * F * 4              # hidden headroom
                   + 2 * D * 4               # ln params
                   + D * F * 2 + F * 4       # W1 + b1
                   + F * D * 2 + D * 4       # W2 + b2
                   + (2 * D * 4 if final_ln else 0))

    # TODO(synk): at production F (e.g. 4096) add an F-tiling grid axis for
    # W1/W2 with an accumulation scratch so the resident weight set stays small
    # on v7x's 64 MiB VMEM.
    return pl.pallas_call(
        kern,
        out_shape=jax.ShapeDtypeStruct((R, D), jnp.float32),
        grid_spec=pltpu.PrefetchScalarGridSpec(
            num_scalar_prefetch=1,
            grid=(R // rb,),
            in_specs=in_specs,
            out_specs=pl.BlockSpec((rb, D), lambda r, lang: (r, 0)),
        ),
        compiler_params=pltpu.CompilerParams(
            dimension_semantics=("parallel",),
            vmem_limit_bytes=_vmem_limit(block_bytes)),
    )(lang_arr, *operands)


# ----------------------------- model glue -----------------------------

def wf_decoder_layer(x, e_out_b, src_madd, trg_madd, p, lang_arr, nhead,
                     final_norm=None):
    B, T, D = x.shape
    a1 = p["attn1"]
    x = attention_sublayer(x, x, trg_madd, lang_arr, p["ln1_g"], p["ln1_b"],
                           a1["Wqkv"], a1["bqkv"], a1["Wo"], a1["bo"],
                           nhead=nhead, self_attn=True)
    a2 = p["attn2"]
    x = attention_sublayer(x, e_out_b, src_madd, lang_arr, p["ln2_g"], p["ln2_b"],
                           a2["Wqkv"], a2["bqkv"], a2["Wo"], a2["bo"],
                           nhead=nhead, self_attn=False)
    ff = p["ff"]
    fg, fb = (final_norm if final_norm is not None else (None, None))
    x_flat = ffn_sublayer(x.reshape(B * T, D), lang_arr, p["ln3_g"], p["ln3_b"],
                          ff["W1"], ff["b1"], ff["W2"], ff["b2"],
                          final_g=fg, final_b=fb)
    return x_flat.reshape(B, T, D)


def wf_transformer_decoder(params, tokens, e_outputs, src_mask, trg_mask,
                           languageID, *, nhead, d_model):
    # Embedding gather + positional encoding kept as XLA glue (no clean Pallas gather).
    x = params["embed"][tokens]                                       # (B, T, D)
    T = tokens.shape[1]
    x = x * jnp.float32(math.sqrt(d_model)) + params["pe"][:T][None, :, :]

    # Additive masks (1 -> 0 keep, 0 -> -1e9) stored in bf16 to halve DMA traffic.
    trg_madd = ((trg_mask - 1.0) * 1e9).astype(jnp.bfloat16)
    src_madd = ((src_mask - 1.0) * 1e9).astype(jnp.bfloat16)
    e_out_b = e_outputs.astype(jnp.bfloat16)                          # read N times -> bf16

    lang_arr = jnp.asarray([languageID], dtype=jnp.int32)             # scalar-prefetch operand

    n_layers = len(params["layers"])
    for li, lp in enumerate(params["layers"]):
        final_norm = ((params["norm_g"], params["norm_b"])
                      if li == n_layers - 1 else None)                # fused final LayerNorm
        x = wf_decoder_layer(x, e_out_b, src_madd, trg_madd, lp, lang_arr,
                             nhead, final_norm=final_norm)
    return x


# ----------------------------- parameter init -----------------------------

def _sinusoidal_pe(max_seq_len, d_model):
    pos = jnp.arange(max_seq_len, dtype=jnp.float32)[:, None]
    i = jnp.arange(0, d_model, 2, dtype=jnp.float32)[None, :]
    angle = pos / jnp.power(10000.0, i / d_model)
    pe = jnp.zeros((max_seq_len, d_model), jnp.float32)
    pe = pe.at[:, 0::2].set(jnp.sin(angle))
    pe = pe.at[:, 1::2].set(jnp.cos(angle))
    return pe


def init_params(key, *, language_num, vocab_size, d_model, N, dim_feedforward,
                max_seq_len):
    def nrm(k, shape, scale=0.02, dtype=jnp.bfloat16):
        return (scale * jax.random.normal(k, shape, jnp.float32)).astype(dtype)

    keys = jax.random.split(key, 2 + N)
    params = {
        "embed": nrm(keys[0], (vocab_size, d_model), 1.0, jnp.float32),
        "pe": _sinusoidal_pe(max_seq_len, d_model),
        "norm_g": jnp.ones((1, d_model), jnp.float32),
        "norm_b": jnp.zeros((1, d_model), jnp.float32),
        "layers": [],
    }

    L = language_num

    def wf_attention(k):
        ks = jax.random.split(k, 2)
        return dict(
            Wqkv=nrm(ks[0], (L, d_model, 3 * d_model)),        # fused Q|K|V bank, bf16
            bqkv=jnp.zeros((L, 1, 3 * d_model), jnp.float32),
            Wo=nrm(ks[1], (L, d_model, d_model)),              # bf16
            bo=jnp.zeros((L, 1, d_model), jnp.float32),
        )

    for li in range(N):
        lk = jax.random.split(keys[2 + li], 4)
        params["layers"].append({
            "ln1_g": jnp.ones((1, d_model), jnp.float32),
            "ln1_b": jnp.zeros((1, d_model), jnp.float32),
            "ln2_g": jnp.ones((1, d_model), jnp.float32),
            "ln2_b": jnp.zeros((1, d_model), jnp.float32),
            "ln3_g": jnp.ones((1, d_model), jnp.float32),
            "ln3_b": jnp.zeros((1, d_model), jnp.float32),
            "attn1": wf_attention(lk[0]),
            "attn2": wf_attention(lk[1]),
            "ff": dict(
                W1=nrm(lk[2], (L, d_model, dim_feedforward)),  # bf16
                b1=jnp.zeros((L, 1, dim_feedforward), jnp.float32),
                W2=nrm(lk[3], (L, dim_feedforward, d_model)),  # bf16
                b2=jnp.zeros((L, 1, d_model), jnp.float32),
            ),
        })
    return params


# ----------------------------- main -----------------------------

if __name__ == "__main__":
    # Small but lane-dense shapes (d_model / dim_feedforward multiples of 128).
    language_num = 2
    vocab_size = 50
    d_model = 128
    N = 2
    nhead = 4
    dim_feedforward = 256
    max_seq_len = 16
    B, T_trg, T_src = 2, 8, 8
    languageID = 1

    key = jax.random.PRNGKey(0)
    k_par, k_tok, k_enc = jax.random.split(key, 3)

    params = init_params(k_par, language_num=language_num, vocab_size=vocab_size,
                         d_model=d_model, N=N, dim_feedforward=dim_feedforward,
                         max_seq_len=max_seq_len)

    tokens = jax.random.randint(k_tok, (B, T_trg), 0, vocab_size, dtype=jnp.int32)
    e_outputs = jax.random.normal(k_enc, (B, T_src, d_model), jnp.float32)
    # masks: 1 = attend, 0 = masked (converted to additive form inside the wrapper)
    trg_mask = jnp.tile(jnp.tril(jnp.ones((T_trg, T_trg), jnp.float32))[None], (B, 1, 1))
    src_mask = jnp.ones((B, T_trg, T_src), jnp.float32)

    out = wf_transformer_decoder(params, tokens, e_outputs, src_mask, trg_mask,
                                 languageID, nhead=nhead, d_model=d_model)
    out = jax.block_until_ready(out)
    assert out.shape == (B, T_trg, d_model)
    assert bool(jnp.all(jnp.isfinite(out)))
    print("KERNEL_OK")
</pallas_src>

<mosaic_0001>
module attributes {stable_mosaic.version = 11 : i64} {
  func.func @_attn_sublayer_kernel(%arg0: i32, %arg1: memref<1xi32, #tpu.memory_space<smem>>, %arg2: memref<1x8x128xf32, #tpu.memory_space<vmem>>, %arg3: memref<1x8x8xbf16, #tpu.memory_space<vmem>>, %arg4: memref<1x128xf32, #tpu.memory_space<vmem>>, %arg5: memref<1x128xf32, #tpu.memory_space<vmem>>, %arg6: memref<1x128x384xbf16, #tpu.memory_space<vmem>>, %arg7: memref<1x1x384xf32, #tpu.memory_space<vmem>>, %arg8: memref<1x128x128xbf16, #tpu.memory_space<vmem>>, %arg9: memref<1x1x128xf32, #tpu.memory_space<vmem>>, %arg10: memref<1x8x128xf32, #tpu.memory_space<vmem>>) attributes {dimension_semantics = [#tpu.dimension_semantics<parallel>], iteration_bounds = array<i64: 2>, scalar_prefetch = 1 : i64, scratch_operands = 0 : i64, tpu.core_type = #tpu.core_type<tc>, window_params = [{transform_indices = @transform_0, window_bounds = array<i64: 1, 8, 128>}, {transform_indices = @transform_1, window_bounds = array<i64: 1, 8, 8>}, {pipeline_mode = #tpu.pipeline_mode<synchronous>, transform_indices = @transform_2, window_bounds = array<i64: 1, 128>}, {pipeline_mode = #tpu.pipeline_mode<synchronous>, transform_indices = @transform_3, window_bounds = array<i64: 1, 128>}, {transform_indices = @transform_4, window_bounds = array<i64: 1, 128, 384>}, {transform_indices = @transform_5, window_bounds = array<i64: 1, 1, 384>}, {transform_indices = @transform_6, window_bounds = array<i64: 1, 128, 128>}, {transform_indices = @transform_7, window_bounds = array<i64: 1, 1, 128>}, {transform_indices = @transform_8, window_bounds = array<i64: 1, 8, 128>}]} {
    %c0 = arith.constant 0 : index
    %c0_0 = arith.constant 0 : index
    %c0_1 = arith.constant 0 : index
    %0 = vector.load %arg2[%c0, %c0_0, %c0_1] : memref<1x8x128xf32, #tpu.memory_space<vmem>>, vector<1x8x128xf32>
    %1 = vector.shape_cast %0 : vector<1x8x128xf32> to vector<8x128xf32>
    %c0_2 = arith.constant 0 : index
    %c0_3 = arith.constant 0 : index
    %2 = vector.load %arg4[%c0_2, %c0_3] : memref<1x128xf32, #tpu.memory_space<vmem>>, vector<1x128xf32>
    %c0_4 = arith.constant 0 : index
    %c0_5 = arith.constant 0 : index
    %3 = vector.load %arg5[%c0_4, %c0_5] : memref<1x128xf32, #tpu.memory_space<vmem>>, vector<1x128xf32>
    %cst = arith.constant dense<0.000000e+00> : vector<8xf32>
    %4 = vector.multi_reduction <add>, %1, %cst [1] : vector<8x128xf32> to vector<8xf32>
    %5 = vector.shape_cast %4 : vector<8xf32> to vector<8x1xf32>
    %cst_6 = arith.constant 1.280000e+02 : f32
    %6 = vector.broadcast %cst_6 : f32 to vector<8x1xf32>
    %7 = arith.divf %5, %6 : vector<8x1xf32>
    %8 = vector.broadcast %7 : vector<8x1xf32> to vector<8x128xf32>
    %9 = arith.subf %1, %8 : vector<8x128xf32>
    %10 = arith.mulf %9, %9 : vector<8x128xf32>
    %cst_7 = arith.constant dense<0.000000e+00> : vector<8xf32>
    %11 = vector.multi_reduction <add>, %10, %cst_7 [1] : vector<8x128xf32> to vector<8xf32>
    %12 = vector.shape_cast %11 : vector<8xf32> to vector<8x1xf32>
    %cst_8 = arith.constant 1.280000e+02 : f32
    %13 = vector.broadcast %cst_8 : f32 to vector<8x1xf32>
    %14 = arith.divf %12, %13 : vector<8x1xf32>
    %cst_9 = arith.constant 9.99999974E-6 : f32
    %15 = vector.broadcast %cst_9 : f32 to vector<8x1xf32>
    %16 = arith.addf %14, %15 : vector<8x1xf32>
    %17 = math.rsqrt %16 : vector<8x1xf32>
    %18 = vector.broadcast %17 : vector<8x1xf32> to vector<8x128xf32>
    %19 = arith.mulf %9, %18 : vector<8x128xf32>
    %20 = vector.broadcast %2 : vector<1x128xf32> to vector<8x128xf32>
    %21 = arith.mulf %19, %20 : vector<8x128xf32>
    %22 = vector.broadcast %3 : vector<1x128xf32> to vector<8x128xf32>
    %23 = arith.addf %21, %22 : vector<8x128xf32>
    %24 = arith.truncf %23 : vector<8x128xf32> to vector<8x128xbf16>
    %c0_10 = arith.constant 0 : index
    %c0_11 = arith.constant 0 : index
    %c0_12 = arith.constant 0 : index
    %25 = vector.load %arg6[%c0_10, %c0_11, %c0_12] : memref<1x128x384xbf16, #tpu.memory_space<vmem>>, vector<1x128x384xbf16>
    %26 = vector.shape_cast %25 : vector<1x128x384xbf16> to vector<128x384xbf16>
    %cst_13 = arith.constant dense<0.000000e+00> : vector<8x384xf32>
    %27 = tpu.matmul %24, %26, %cst_13 {dimension_numbers = #tpu.dot_dimension_numbers<[1], [0], [0], [1], [0, 0, 1, 1], [], []>} : vector<8x128xbf16>, vector<128x384xbf16>, vector<8x384xf32> -> vector<8x384xf32>
    %c0_14 = arith.constant 0 : index
    %c0_15 = arith.constant 0 : index
    %c0_16 = arith.constant 0 : index
    %28 = vector.load %arg7[%c0_14, %c0_15, %c0_16] : memref<1x1x384xf32, #tpu.memory_space<vmem>>, vector<1x1x384xf32>
    %29 = vector.shape_cast %28 : vector<1x1x384xf32> to vector<1x384xf32>
    %30 = vector.broadcast %29 : vector<1x384xf32> to vector<8x384xf32>
    %31 = arith.addf %27, %30 : vector<8x384xf32>
    %32 = vector.extract_strided_slice %31 {offsets = [0, 0], sizes = [8, 128], strides = [1, 1]} : vector<8x384xf32> to vector<8x128xf32>
    %cst_17 = arith.constant 0.176776692 : f32
    %33 = vector.broadcast %cst_17 : f32 to vector<8x128xf32>
    %34 = arith.mulf %32, %33 : vector<8x128xf32>
    %35 = vector.extract_strided_slice %31 {offsets = [0, 128], sizes = [8, 128], strides = [1, 1]} : vector<8x384xf32> to vector<8x128xf32>
    %36 = vector.extract_strided_slice %31 {offsets = [0, 256], sizes = [8, 128], strides = [1, 1]} : vector<8x384xf32> to vector<8x128xf32>
    %37 = arith.truncf %34 : vector<8x128xf32> to vector<8x128xbf16>
    %38 = arith.truncf %35 : vector<8x128xf32> to vector<8x128xbf16>
    %39 = arith.truncf %36 : vector<8x128xf32> to vector<8x128xbf16>
    %c0_18 = arith.constant 0 : index
    %c0_19 = arith.constant 0 : index
    %c0_20 = arith.constant 0 : index
    %40 = vector.load %arg3[%c0_18, %c0_19, %c0_20] : memref<1x8x8xbf16, #tpu.memory_space<vmem>>, vector<1x8x8xbf16>
    %41 = vector.shape_cast %40 : vector<1x8x8xbf16> to vector<8x8xbf16>
    %42 = arith.extf %41 : vector<8x8xbf16> to vector<8x8xf32>
    %43 = vector.extract_strided_slice %37 {offsets = [0, 0], sizes = [8, 32], strides = [1, 1]} : vector<8x128xbf16> to vector<8x32xbf16>
    %44 = vector.extract_strided_slice %38 {offsets = [0, 0], sizes = [8, 32], strides = [1, 1]} : vector<8x128xbf16> to vector<8x32xbf16>
    %cst_21 = arith.constant dense<0.000000e+00> : vector<8x8xf32>
    %45 = tpu.matmul %43, %44, %cst_21 {dimension_numbers = #tpu.dot_dimension_numbers<[1], [1], [0], [0], [0, 0, 1, 0], [], []>} : vector<8x32xbf16>, vector<8x32xbf16>, vector<8x8xf32> -> vector<8x8xf32>
    %46 = arith.addf %45, %42 : vector<8x8xf32>
    %cst_22 = arith.constant dense<0xFF800000> : vector<8xf32>
    %47 = vector.multi_reduction <maximumf>, %46, %cst_22 [1] : vector<8x8xf32> to vector<8xf32>
    %48 = vector.shape_cast %47 : vector<8xf32> to vector<8x1xf32>
    %49 = vector.broadcast %48 : vector<8x1xf32> to vector<8x8xf32>
    %50 = arith.subf %46, %49 : vector<8x8xf32>
    %51 = math.exp %50 : vector<8x8xf32>
    %cst_23 = arith.constant dense<0.000000e+00> : vector<8xf32>
    %52 = vector.multi_reduction <add>, %51, %cst_23 [1] : vector<8x8xf32> to vector<8xf32>
    %53 = vector.shape_cast %52 : vector<8xf32> to vector<8x1xf32>
    %54 = tpu.reciprocal %53 {approx = true} : vector<8x1xf32> -> vector<8x1xf32>
    %55 = vector.broadcast %54 : vector<8x1xf32> to vector<8x8xf32>
    %56 = arith.mulf %51, %55 : vector<8x8xf32>
    %57 = arith.truncf %56 : vector<8x8xf32> to vector<8x8xbf16>
    %58 = vector.extract_strided_slice %39 {offsets = [0, 0], sizes = [8, 32], strides = [1, 1]} : vector<8x128xbf16> to vector<8x32xbf16>
    %cst_24 = arith.constant dense<0.000000e+00> : vector<8x32xf32>
    %59 = tpu.matmul %57, %58, %cst_24 {dimension_numbers = #tpu.dot_dimension_numbers<[1], [0], [0], [1], [0, 0, 1, 1], [], []>} : vector<8x8xbf16>, vector<8x32xbf16>, vector<8x32xf32> -> vector<8x32xf32>
    %60 = vector.extract_strided_slice %37 {offsets = [0, 32], sizes = [8, 32], strides = [1, 1]} : vector<8x128xbf16> to vector<8x32xbf16>
    %61 = vector.extract_strided_slice %38 {offsets = [0, 32], sizes = [8, 32], strides = [1, 1]} : vector<8x128xbf16> to vector<8x32xbf16>
    %cst_25 = arith.constant dense<0.000000e+00> : vector<8x8xf32>
    %62 = tpu.matmul %60, %61, %cst_25 {dimension_numbers = #tpu.dot_dimension_numbers<[1], [1], [0], [0], [0, 0, 1, 0], [], []>} : vector<8x32xbf16>, vector<8x32xbf16>, vector<8x8xf32> -> vector<8x8xf32>
    %63 = arith.addf %62, %42 : vector<8x8xf32>
    %cst_26 = arith.constant dense<0xFF800000> : vector<8xf32>
    %64 = vector.multi_reduction <maximumf>, %63, %cst_26 [1] : vector<8x8xf32> to vector<8xf32>
    %65 = vector.shape_cast %64 : vector<8xf32> to vector<8x1xf32>
    %66 = vector.broadcast %65 : vector<8x1xf32> to vector<8x8xf32>
    %67 = arith.subf %63, %66 : vector<8x8xf32>
    %68 = math.exp %67 : vector<8x8xf32>
    %cst_27 = arith.constant dense<0.000000e+00> : vector<8xf32>
    %69 = vector.multi_reduction <add>, %68, %cst_27 [1] : vector<8x8xf32> to vector<8xf32>
    %70 = vector.shape_cast %69 : vector<8xf32> to vector<8x1xf32>
    %71 = tpu.reciprocal %70 {approx = true} : vector<8x1xf32> -> vector<8x1xf32>
    %72 = vector.broadcast %71 : vector<8x1xf32> to vector<8x8xf32>
    %73 = arith.mulf %68, %72 : vector<8x8xf32>
    %74 = arith.truncf %73 : vector<8x8xf32> to vector<8x8xbf16>
    %75 = vector.extract_strided_slice %39 {offsets = [0, 32], sizes = [8, 32], strides = [1, 1]} : vector<8x128xbf16> to vector<8x32xbf16>
    %cst_28 = arith.constant dense<0.000000e+00> : vector<8x32xf32>
    %76 = tpu.matmul %74, %75, %cst_28 {dimension_numbers = #tpu.dot_dimension_numbers<[1], [0], [0], [1], [0, 0, 1, 1], [], []>} : vector<8x8xbf16>, vector<8x32xbf16>, vector<8x32xf32> -> vector<8x32xf32>
    %77 = vector.extract_strided_slice %37 {offsets = [0, 64], sizes = [8, 32], strides = [1, 1]} : vector<8x128xbf16> to vector<8x32xbf16>
    %78 = vector.extract_strided_slice %38 {offsets = [0, 64], sizes = [8, 32], strides = [1, 1]} : vector<8x128xbf16> to vector<8x32xbf16>
    %cst_29 = arith.constant dense<0.000000e+00> : vector<8x8xf32>
    %79 = tpu.matmul %77, %78, %cst_29 {dimension_numbers = #tpu.dot_dimension_numbers<[1], [1], [0], [0], [0, 0, 1, 0], [], []>} : vector<8x32xbf16>, vector<8x32xbf16>, vector<8x8xf32> -> vector<8x8xf32>
    %80 = arith.addf %79, %42 : vector<8x8xf32>
    %cst_30 = arith.constant dense<0xFF800000> : vector<8xf32>
    %81 = vector.multi_reduction <maximumf>, %80, %cst_30 [1] : vector<8x8xf32> to vector<8xf32>
    %82 = vector.shape_cast %81 : vector<8xf32> to vector<8x1xf32>
    %83 = vector.broadcast %82 : vector<8x1xf32> to vector<8x8xf32>
    %84 = arith.subf %80, %83 : vector<8x8xf32>
    %85 = math.exp %84 : vector<8x8xf32>
    %cst_31 = arith.constant dense<0.000000e+00> : vector<8xf32>
    %86 = vector.multi_reduction <add>, %85, %cst_31 [1] : vector<8x8xf32> to vector<8xf32>
    %87 = vector.shape_cast %86 : vector<8xf32> to vector<8x1xf32>
    %88 = tpu.reciprocal %87 {approx = true} : vector<8x1xf32> -> vector<8x1xf32>
    %89 = vector.broadcast %88 : vector<8x1xf32> to vector<8x8xf32>
    %90 = arith.mulf %85, %89 : vector<8x8xf32>
    %91 = arith.truncf %90 : vector<8x8xf32> to vector<8x8xbf16>
    %92 = vector.extract_strided_slice %39 {offsets = [0, 64], sizes = [8, 32], strides = [1, 1]} : vector<8x128xbf16> to vector<8x32xbf16>
    %cst_32 = arith.constant dense<0.000000e+00> : vector<8x32xf32>
    %93 = tpu.matmul %91, %92, %cst_32 {dimension_numbers = #tpu.dot_dimension_numbers<[1], [0], [0], [1], [0, 0, 1, 1], [], []>} : vector<8x8xbf16>, vector<8x32xbf16>, vector<8x32xf32> -> vector<8x32xf32>
    %94 = vector.extract_strided_slice %37 {offsets = [0, 96], sizes = [8, 32], strides = [1, 1]} : vector<8x128xbf16> to vector<8x32xbf16>
    %95 = vector.extract_strided_slice %38 {offsets = [0, 96], sizes = [8, 32], strides = [1, 1]} : vector<8x128xbf16> to vector<8x32xbf16>
    %cst_33 = arith.constant dense<0.000000e+00> : vector<8x8xf32>
    %96 = tpu.matmul %94, %95, %cst_33 {dimension_numbers = #tpu.dot_dimension_numbers<[1], [1], [0], [0], [0, 0, 1, 0], [], []>} : vector<8x32xbf16>, vector<8x32xbf16>, vector<8x8xf32> -> vector<8x8xf32>
    %97 = arith.addf %96, %42 : vector<8x8xf32>
    %cst_34 = arith.constant dense<0xFF800000> : vector<8xf32>
    %98 = vector.multi_reduction <maximumf>, %97, %cst_34 [1] : vector<8x8xf32> to vector<8xf32>
    %99 = vector.shape_cast %98 : vector<8xf32> to vector<8x1xf32>
    %100 = vector.broadcast %99 : vector<8x1xf32> to vector<8x8xf32>
    %101 = arith.subf %97, %100 : vector<8x8xf32>
    %102 = math.exp %101 : vector<8x8xf32>
    %cst_35 = arith.constant dense<0.000000e+00> : vector<8xf32>
    %103 = vector.multi_reduction <add>, %102, %cst_35 [1] : vector<8x8xf32> to vector<8xf32>
    %104 = vector.shape_cast %103 : vector<8xf32> to vector<8x1xf32>
    %105 = tpu.reciprocal %104 {approx = true} : vector<8x1xf32> -> vector<8x1xf32>
    %106 = vector.broadcast %105 : vector<8x1xf32> to vector<8x8xf32>
    %107 = arith.mulf %102, %106 : vector<8x8xf32>
    %108 = arith.truncf %107 : vector<8x8xf32> to vector<8x8xbf16>
    %109 = vector.extract_strided_slice %39 {offsets = [0, 96], sizes = [8, 32], strides = [1, 1]} : vector<8x128xbf16> to vector<8x32xbf16>
    %cst_36 = arith.constant dense<0.000000e+00> : vector<8x32xf32>
    %110 = tpu.matmul %108, %109, %cst_36 {dimension_numbers = #tpu.dot_dimension_numbers<[1], [0], [0], [1], [0, 0, 1, 1], [], []>} : vector<8x8xbf16>, vector<8x32xbf16>, vector<8x32xf32> -> vector<8x32xf32>
    %111 = tpu.concatenate %59, %76, %93, %110 in 1 : vector<8x32xf32>, vector<8x32xf32>, vector<8x32xf32>, vector<8x32xf32> -> vector<8x128xf32>
    %112 = arith.truncf %111 : vector<8x128xf32> to vector<8x128xbf16>
    %c0_37 = arith.constant 0 : index
    %c0_38 = arith.constant 0 : index
    %c0_39 = arith.constant 0 : index
    %113 = vector.load %arg8[%c0_37, %c0_38, %c0_39] : memref<1x128x128xbf16, #tpu.memory_space<vmem>>, vector<1x128x128xbf16>
    %114 = vector.shape_cast %113 : vector<1x128x128xbf16> to vector<128x128xbf16>
    %cst_40 = arith.constant dense<0.000000e+00> : vector<8x128xf32>
    %115 = tpu.matmul %112, %114, %cst_40 {dimension_numbers = #tpu.dot_dimension_numbers<[1], [0], [0], [1], [0, 0, 1, 1], [], []>} : vector<8x128xbf16>, vector<128x128xbf16>, vector<8x128xf32> -> vector<8x128xf32>
    %116 = arith.addf %1, %115 : vector<8x128xf32>
    %c0_41 = arith.constant 0 : index
    %c0_42 = arith.constant 0 : index
    %c0_43 = arith.constant 0 : index
    %117 = vector.load %arg9[%c0_41, %c0_42, %c0_43] : memref<1x1x128xf32, #tpu.memory_space<vmem>>, vector<1x1x128xf32>
    %118 = vector.shape_cast %117 : vector<1x1x128xf32> to vector<1x128xf32>
    %119 = vector.broadcast %118 : vector<1x128xf32> to vector<8x128xf32>
    %120 = arith.addf %116, %119 : vector<8x128xf32>
    %c0_44 = arith.constant 0 : index
    %c0_45 = arith.constant 0 : index
    %c0_46 = arith.constant 0 : index
    %121 = vector.load %arg10[%c0_44, %c0_45, %c0_46] : memref<1x8x128xf32, #tpu.memory_space<vmem>>, vector<1x8x128xf32>
    %122 = vector.shape_cast %121 : vector<1x8x128xf32> to vector<8x128xf32>
    %123 = vector.shape_cast %120 : vector<8x128xf32> to vector<1x8x128xf32>
    tpu.vector_store %arg10[%c0_44, %c0_45, %c0_46], %123 {strides = array<i32>} : memref<1x8x128xf32, #tpu.memory_space<vmem>>, vector<1x8x128xf32>,
    return
  }
  func.func @transform_0(%arg0: i32, %arg1: memref<1xi32, #tpu.memory_space<smem>>) -> (i32, i32, i32) {
    %c0_i32 = arith.constant 0 : i32
    %c0_i32_0 = arith.constant 0 : i32
    %c0_i32_1 = arith.constant 0 : i32
    return %arg0, %c0_i32, %c0_i32_0 : i32, i32, i32
  }
  func.func @transform_1(%arg0: i32, %arg1: memref<1xi32, #tpu.memory_space<smem>>) -> (i32, i32, i32) {
    %c0_i32 = arith.constant 0 : i32
    %c0_i32_0 = arith.constant 0 : i32
    %c0_i32_1 = arith.constant 0 : i32
    return %arg0, %c0_i32, %c0_i32_0 : i32, i32, i32
  }
  func.func @transform_2(%arg0: i32, %arg1: memref<1xi32, #tpu.memory_space<smem>>) -> (i32, i32) {
    %c0_i32 = arith.constant 0 : i32
    %c0_i32_0 = arith.constant 0 : i32
    %c0_i32_1 = arith.constant 0 : i32
    return %c0_i32, %c0_i32_0 : i32, i32
  }
  func.func @transform_3(%arg0: i32, %arg1: memref<1xi32, #tpu.memory_space<smem>>) -> (i32, i32) {
    %c0_i32 = arith.constant 0 : i32
    %c0_i32_0 = arith.constant 0 : i32
    %c0_i32_1 = arith.constant 0 : i32
    return %c0_i32, %c0_i32_0 : i32, i32
  }
  func.func @transform_4(%arg0: i32, %arg1: memref<1xi32, #tpu.memory_space<smem>>) -> (i32, i32, i32) {
    %c0 = arith.constant 0 : index
    %0 = memref.load %arg1[%c0] : memref<1xi32, #tpu.memory_space<smem>>
    %c0_i32 = arith.constant 0 : i32
    %c0_i32_0 = arith.constant 0 : i32
    %c0_i32_1 = arith.constant 0 : i32
    return %0, %c0_i32, %c0_i32_0 : i32, i32, i32
  }
  func.func @transform_5(%arg0: i32, %arg1: memref<1xi32, #tpu.memory_space<smem>>) -> (i32, i32, i32) {
    %c0 = arith.constant 0 : index
    %0 = memref.load %arg1[%c0] : memref<1xi32, #tpu.memory_space<smem>>
    %c0_i32 = arith.constant 0 : i32
    %c0_i32_0 = arith.constant 0 : i32
    %c0_i32_1 = arith.constant 0 : i32
    return %0, %c0_i32, %c0_i32_0 : i32, i32, i32
  }
  func.func @transform_6(%arg0: i32, %arg1: memref<1xi32, #tpu.memory_space<smem>>) -> (i32, i32, i32) {
    %c0 = arith.constant 0 : index
    %0 = memref.load %arg1[%c0] : memref<1xi32, #tpu.memory_space<smem>>
    %c0_i32 = arith.constant 0 : i32
    %c0_i32_0 = arith.constant 0 : i32
    %c0_i32_1 = arith.constant 0 : i32
    return %0, %c0_i32, %c0_i32_0 : i32, i32, i32
  }
  func.func @transform_7(%arg0: i32, %arg1: memref<1xi32, #tpu.memory_space<smem>>) -> (i32, i32, i32) {
    %c0 = arith.constant 0 : index
    %0 = memref.load %arg1[%c0] : memref<1xi32, #tpu.memory_space<smem>>
    %c0_i32 = arith.constant 0 : i32
    %c0_i32_0 = arith.constant 0 : i32
    %c0_i32_1 = arith.constant 0 : i32
    return %0, %c0_i32, %c0_i32_0 : i32, i32, i32
  }
  func.func @transform_8(%arg0: i32, %arg1: memref<1xi32, #tpu.memory_space<smem>>) -> (i32, i32, i32) {
    %c0_i32 = arith.constant 0 : i32
    %c0_i32_0 = arith.constant 0 : i32
    %c0_i32_1 = arith.constant 0 : i32
    return %arg0, %c0_i32, %c0_i32_0 : i32, i32, i32
  }
}

</mosaic_0001>

<llo_original>
// kernel: tpu_custom_call.1
$region0: #{tpu_custom_call.1}
  #allocation0 [shape = 'u32[]', space=smem, size = 0x4, offset = 0x4, fixed_abs, tag = 'smem constant byte address 0x4 - core index']
  #allocation1 [shape = 'u32[144,128]{1,0:T(1,128)}', space=vmem, size = 0x12000, scoped, tag = 'internal scratch']
  #allocation2 [shape = 's32[1]{0}', space=sflag, size = 0x4, scoped, tag = 'scoped memory for tpu_custom_call.1']
  #allocation3 [shape = 's32[1]{0:T(128)S(6)}', space=smem, size = 0x200, scoped, tag = 'prefetched SMEM operand 0']
  %s0 = inlined_call_operand.<no memory space> [shape: s32[1], index: 0, kind: input, shape index: {}]
  %s1 = inlined_call_operand.hbm [shape: f32[2,8,128], index: 1, kind: input, shape index: {}]
  %s2 = inlined_call_operand.hbm [shape: bf16[2,8,8], index: 2, kind: input, shape index: {}]
  %s3 = inlined_call_operand.vmem [shape: f32[1,128], index: 3, kind: input, shape index: {}]
  %s4 = inlined_call_operand.vmem [shape: f32[1,128], index: 4, kind: input, shape index: {}]
  %s5 = inlined_call_operand.hbm [shape: bf16[2,128,384], index: 5, kind: input, shape index: {}]
  %s6 = inlined_call_operand.vmem [shape: f32[2,1,384], index: 6, kind: input, shape index: {}]
  %s7 = inlined_call_operand.hbm [shape: bf16[2,128,128], index: 7, kind: input, shape index: {}]
  %s8 = inlined_call_operand.vmem [shape: f32[2,1,128], index: 8, kind: input, shape index: {}]
  %s9 = inlined_call_operand.hbm [shape: f32[2,8,128], index: 9, kind: output, shape index: {}]
  %s10 = sld [smem:[#allocation0]]
  $region81: #{tpu_custom_call.1} parent=0
    _
  %s12 = ssub.s32 1, %s10
  %s13 = scalar_select 0, %s12, %s10
  %14 = sst [smem:[#allocation3]] %s0
  $region1: #{tpu_custom_call.1} parent=0
    #allocation4 [shape = 'u8[8192]{0}', space=vmem, size = 0x2000, scoped, tag = 'input window, operand 1']
    #allocation5 [shape = 's32[2]{0}', space=sflag, size = 0x8, scoped, tag = 'scoped memory for tpu_custom_call.1']
    #allocation6 [shape = 's32[2]{0}', space=sflag, size = 0x8, scoped, tag = 'scoped memory for tpu_custom_call.1']
    #allocation7 [shape = 'u8[4096]{0}', space=vmem, size = 0x1000, scoped, tag = 'input window, operand 2']
    #allocation8 [shape = 's32[2]{0}', space=sflag, size = 0x8, scoped, tag = 'scoped memory for tpu_custom_call.1']
    #allocation9 [shape = 'u8[98304]{0}', space=vmem, size = 0x18000, scoped, tag = 'input window, operand 5, single buffered']
    #allocation10 [shape = 'u8[32768]{0}', space=vmem, size = 0x8000, scoped, tag = 'input window, operand 7, single buffered']
    #allocation11 [shape = 's32[1]{0}', space=sflag, size = 0x4, scoped, tag = 'scoped memory for tpu_custom_call.1']
    #allocation12 [shape = 'u8[8192]{0}', space=vmem, size = 0x2000, scoped, tag = 'output window, operand 0']
    %15 = vsyncpa [#allocation5], 0
    %s16 = scalar_lea.sflag [#allocation5], 1
    %17 = vsyncpa %s16, 0
    %18 = vsyncpa [#allocation8], 0
    %s19 = scalar_lea.sflag [#allocation8], 1
    %20 = vsyncpa %s19, 0
    %21 = vsyncpa [#allocation11], 0
    %22 = vsyncpa [#allocation6], 0
    %s23 = scalar_lea.sflag [#allocation6], 1
    %24 = vsyncpa %s23, 0
    loop: start=0, step=1, limit=4
    $region2: #{tpu_custom_call.1} parent=1 // loop_pre_header
      _
    $region3: #{tpu_custom_call.1} parent=1 // loop_header
      %s26 = sphi 0, %s30
      %p27 = scmp.ge.s32.totalorder %s26, 4
      %s36 = sphi 0, %s38
      %s39 = sphi 0, %s36
      %s40 = sphi 0, %s39
      %s56 = sphi 0, %s40
      %s62 = sphi 0, %s64
      %s65 = sphi 0, %s62
      %s66 = sphi 0, %s65
      %s82 = sphi 0, %s66
      %s86 = sphi 0, %s86
      %s88 = sphi 0, %s86
      %s89 = sphi 0, %s88
      %s103 = sphi 0, %s89
      %s107 = sphi 0, %s107
      %s109 = sphi 0, %s107
      %s110 = sphi 0, %s109
      %s124 = sphi 0, %s110
      %s132 = sphi 0, %s134
      %s135 = sphi 0, %s132
      %s136 = sphi 0, %s135
      %s152 = sphi 0, %s136
      %s160 = sphi 0, %s162
      %s163 = sphi 0, %s160
      %s164 = sphi 0, %s163
      %s180 = sphi 0, %s164
      %s188 = sphi 0, %s190
      %s191 = sphi 0, %s188
      %s192 = sphi 0, %s191
      %s208 = sphi 0, %s192
      %s216 = sphi 0, %s218
      %s219 = sphi 0, %s216
      %s220 = sphi 0, %s219
      %s236 = sphi 0, %s220
      %s242 = sphi 0, %s244
      %s245 = sphi 0, %s242
      %s246 = sphi 0, %s245
      %s262 = sphi 0, %s246
    $region4: #{tpu_custom_call.1} parent=1 // loop_header_branch
      %29 = sbr.rel (%p27) target = $region8
    $region5: #{tpu_custom_call.1} parent=1 // loop_body
      %s31 = ssub.s32 %s26, 1
      %s32 = ssub.s32 %s26, 2
      %s33 = sadd.s32 %s26, 1
      %s34 = ssub.s32 %s26, %s33
      %p35 = scmp.eq.s32.totalorder %s34, 0
      %s37 = sadd.s32 %s36, 1
      %s38 = scalar_select %p35, %s36, %s37
      %p41 = pneg %p35
      %p42 = scmp.eq.s32.totalorder %s26, 1
      %p43 = por %p41, %p42
      %p44 = scmp.ne.s32.totalorder %s36, %s39
      %p45 = scmp.eq.s32.totalorder %s26, 0
      %p46 = por %p44, %p45
      %p47 = scmp.ne.s32.totalorder %s36, %s39
      %p48 = scmp.eq.s32.totalorder %s31, 1
      %p49 = por %p47, %p48
      %p50 = scmp.ne.s32.totalorder %s39, %s40
      %p51 = scmp.eq.s32.totalorder %s31, 0
      %p52 = por %p50, %p51
      %p53 = scmp.ne.s32.totalorder %s39, %s40
      %p54 = scmp.eq.s32.totalorder %s32, 1
      %p55 = por %p53, %p54
      %p57 = scmp.ne.s32.totalorder %s40, %s56
      %p58 = scmp.eq.s32.totalorder %s32, 0
      %p59 = por %p57, %p58
      %s60 = ssub.s32 %s26, %s33
      %p61 = scmp.eq.s32.totalorder %s60, 0
      %s63 = sadd.s32 %s62, 1
      %s64 = scalar_select %p61, %s62, %s63
      %p67 = pneg %p61
      %p68 = scmp.eq.s32.totalorder %s26, 1
      %p69 = por %p67, %p68
      %p70 = scmp.ne.s32.totalorder %s62, %s65
      %p71 = scmp.eq.s32.totalorder %s26, 0
      %p72 = por %p70, %p71
      %p73 = scmp.ne.s32.totalorder %s62, %s65
      %p74 = scmp.eq.s32.totalorder %s31, 1
      %p75 = por %p73, %p74
      %p76 = scmp.ne.s32.totalorder %s65, %s66
      %p77 = scmp.eq.s32.totalorder %s31, 0
      %p78 = por %p76, %p77
      %p79 = scmp.ne.s32.totalorder %s65, %s66
      %p80 = scmp.eq.s32.totalorder %s32, 1
      %p81 = por %p79, %p80
      %p83 = scmp.ne.s32.totalorder %s66, %s82
      %p84 = scmp.eq.s32.totalorder %s32, 0
      %p85 = por %p83, %p84
      %s87 = sadd.s32 %s86, 1
      %p90 = scmp.eq.s32.totalorder %s26, 1
      %p91 = scmp.ne.s32.totalorder %s86, %s88
      %p92 = scmp.eq.s32.totalorder %s26, 0
      %p93 = por %p91, %p92
      %p94 = scmp.ne.s32.totalorder %s86, %s88
      %p95 = scmp.eq.s32.totalorder %s31, 1
      %p96 = por %p94, %p95
      %p97 = scmp.ne.s32.totalorder %s88, %s89
      %p98 = scmp.eq.s32.totalorder %s31, 0
      %p99 = por %p97, %p98
      %p100 = scmp.ne.s32.totalorder %s88, %s89
      %p101 = scmp.eq.s32.totalorder %s32, 1
      %p102 = por %p100, %p101
      %p104 = scmp.ne.s32.totalorder %s89, %s103
      %p105 = scmp.eq.s32.totalorder %s32, 0
      %p106 = por %p104, %p105
      %s108 = sadd.s32 %s107, 1
      %p111 = scmp.eq.s32.totalorder %s26, 1
      %p112 = scmp.ne.s32.totalorder %s107, %s109
      %p113 = scmp.eq.s32.totalorder %s26, 0
      %p114 = por %p112, %p113
      %p115 = scmp.ne.s32.totalorder %s107, %s109
      %p116 = scmp.eq.s32.totalorder %s31, 1
      %p117 = por %p115, %p116
      %p118 = scmp.ne.s32.totalorder %s109, %s110
      %p119 = scmp.eq.s32.totalorder %s31, 0
      %p120 = por %p118, %p119
      %p121 = scmp.ne.s32.totalorder %s109, %s110
      %p122 = scmp.eq.s32.totalorder %s32, 1
      %p123 = por %p121, %p122
      %p125 = scmp.ne.s32.totalorder %s110, %s124
      %p126 = scmp.eq.s32.totalorder %s32, 0
      %p127 = por %p125, %p126
      %s128 = sld [smem:[#allocation3]]
      %s129 = sld [smem:[#allocation3]]
      %s130 = ssub.s32 %s128, %s129
      %p131 = scmp.eq.s32.totalorder %s130, 0
      %s133 = sadd.s32 %s132, 1
      %s134 = scalar_select %p131, %s132, %s133
      %p137 = pneg %p131
      %p138 = scmp.eq.s32.totalorder %s26, 1
      %p139 = por %p137, %p138
      %p140 = scmp.ne.s32.totalorder %s132, %s135
      %p141 = scmp.eq.s32.totalorder %s26, 0
      %p142 = por %p140, %p141
      %p143 = scmp.ne.s32.totalorder %s132, %s135
      %p144 = scmp.eq.s32.totalorder %s31, 1
      %p145 = por %p143, %p144
      %p146 = scmp.ne.s32.totalorder %s135, %s136
      %p147 = scmp.eq.s32.totalorder %s31, 0
      %p148 = por %p146, %p147
      %p149 = scmp.ne.s32.totalorder %s135, %s136
      %p150 = scmp.eq.s32.totalorder %s32, 1
      %p151 = por %p149, %p150
      %p153 = scmp.ne.s32.totalorder %s136, %s152
      %p154 = scmp.eq.s32.totalorder %s32, 0
      %p155 = por %p153, %p154
      %s156 = sld [smem:[#allocation3]]
      %s157 = sld [smem:[#allocation3]]
      %s158 = ssub.s32 %s156, %s157
      %p159 = scmp.eq.s32.totalorder %s158, 0
      %s161 = sadd.s32 %s160, 1
      %s162 = scalar_select %p159, %s160, %s161
      %p165 = pneg %p159
      %p166 = scmp.eq.s32.totalorder %s26, 1
      %p167 = por %p165, %p166
      %p168 = scmp.ne.s32.totalorder %s160, %s163
      %p169 = scmp.eq.s32.totalorder %s26, 0
      %p170 = por %p168, %p169
      %p171 = scmp.ne.s32.totalorder %s160, %s163
      %p172 = scmp.eq.s32.totalorder %s31, 1
      %p173 = por %p171, %p172
      %p174 = scmp.ne.s32.totalorder %s163, %s164
      %p175 = scmp.eq.s32.totalorder %s31, 0
      %p176 = por %p174, %p175
      %p177 = scmp.ne.s32.totalorder %s163, %s164
      %p178 = scmp.eq.s32.totalorder %s32, 1
      %p179 = por %p177, %p178
      %p181 = scmp.ne.s32.totalorder %s164, %s180
      %p182 = scmp.eq.s32.totalorder %s32, 0
      %p183 = por %p181, %p182
      %s184 = sld [smem:[#allocation3]]
      %s185 = sld [smem:[#allocation3]]
      %s186 = ssub.s32 %s184, %s185
      %p187 = scmp.eq.s32.totalorder %s186, 0
      %s189 = sadd.s32 %s188, 1
      %s190 = scalar_select %p187, %s188, %s189
      %p193 = pneg %p187
      %p194 = scmp.eq.s32.totalorder %s26, 1
      %p195 = por %p193, %p194
      %p196 = scmp.ne.s32.totalorder %s188, %s191
      %p197 = scmp.eq.s32.totalorder %s26, 0
      %p198 = por %p196, %p197
      %p199 = scmp.ne.s32.totalorder %s188, %s191
      %p200 = scmp.eq.s32.totalorder %s31, 1
      %p201 = por %p199, %p200
      %p202 = scmp.ne.s32.totalorder %s191, %s192
      %p203 = scmp.eq.s32.totalorder %s31, 0
      %p204 = por %p202, %p203
      %p205 = scmp.ne.s32.totalorder %s191, %s192
      %p206 = scmp.eq.s32.totalorder %s32, 1
      %p207 = por %p205, %p206
      %p209 = scmp.ne.s32.totalorder %s192, %s208
      %p210 = scmp.eq.s32.totalorder %s32, 0
      %p211 = por %p209, %p210
      %s212 = sld [smem:[#allocation3]]
      %s213 = sld [smem:[#allocation3]]
      %s214 = ssub.s32 %s212, %s213
      %p215 = scmp.eq.s32.totalorder %s214, 0
      %s217 = sadd.s32 %s216, 1
      %s218 = scalar_select %p215, %s216, %s217
      %p221 = pneg %p215
      %p222 = scmp.eq.s32.totalorder %s26, 1
      %p223 = por %p221, %p222
      %p224 = scmp.ne.s32.totalorder %s216, %s219
      %p225 = scmp.eq.s32.totalorder %s26, 0
      %p226 = por %p224, %p225
      %p227 = scmp.ne.s32.totalorder %s216, %s219
      %p228 = scmp.eq.s32.totalorder %s31, 1
      %p229 = por %p227, %p228
      %p230 = scmp.ne.s32.totalorder %s219, %s220
      %p231 = scmp.eq.s32.totalorder %s31, 0
      %p232 = por %p230, %p231
      %p233 = scmp.ne.s32.totalorder %s219, %s220
      %p234 = scmp.eq.s32.totalorder %s32, 1
      %p235 = por %p233, %p234
      %p237 = scmp.ne.s32.totalorder %s220, %s236
      %p238 = scmp.eq.s32.totalorder %s32, 0
      %p239 = por %p237, %p238
      %s240 = ssub.s32 %s26, %s33
      %p241 = scmp.eq.s32.totalorder %s240, 0
      %s243 = sadd.s32 %s242, 1
      %s244 = scalar_select %p241, %s242, %s243
      %p247 = pneg %p241
      %p248 = scmp.eq.s32.totalorder %s26, 1
      %p249 = por %p247, %p248
      %p250 = scmp.ne.s32.totalorder %s242, %s245
      %p251 = scmp.eq.s32.totalorder %s26, 0
      %p252 = por %p250, %p251
      %p253 = scmp.ne.s32.totalorder %s242, %s245
      %p254 = scmp.eq.s32.totalorder %s31, 1
      %p255 = por %p253, %p254
      %p256 = scmp.ne.s32.totalorder %s245, %s246
      %p257 = scmp.eq.s32.totalorder %s31, 0
      %p258 = por %p256, %p257
      %p259 = scmp.ne.s32.totalorder %s245, %s246
      %p260 = scmp.eq.s32.totalorder %s32, 1
      %p261 = por %p259, %p260
      %p263 = scmp.ne.s32.totalorder %s246, %s262
      %p264 = scmp.eq.s32.totalorder %s32, 0
      %p265 = por %p263, %p264
      %p266 = scmp.le.s32.totalorder 1, %s26
      %p267 = scmp.lt.s32.totalorder %s26, 3
      %p268 = pnand %p266, %p267
      %p269 = pneg %p268
      // Predicated region
      $region9: #{tpu_custom_call.1} parent=5 // pred_check
        _
      $region10: #{tpu_custom_call.1} parent=5 // pred_check_branch
        %271 = sbr.rel (%p268) target = $region12
      $region11: #{tpu_custom_call.1} parent=5 // pred_region
        %s272 = ssub.s32 %s26, 1
        // Predicated region
        $region13: #{tpu_custom_call.1} parent=11 // pred_check
          %p273 = pneg %p99
        $region14: #{tpu_custom_call.1} parent=11 // pred_check_branch
          %275 = sbr.rel (%p273) target = $region16
        $region15: #{tpu_custom_call.1} parent=11 // pred_region
          _
        $region16: #{tpu_custom_call.1} parent=11 // pred_fallthru
          _
        // Predicated region
        $region17: #{tpu_custom_call.1} parent=11 // pred_check
          %p276 = pneg %p120
        $region18: #{tpu_custom_call.1} parent=11 // pred_check_branch
          %278 = sbr.rel (%p276) target = $region20
        $region19: #{tpu_custom_call.1} parent=11 // pred_region
          _
        $region20: #{tpu_custom_call.1} parent=11 // pred_fallthru
          _
        // Predicated region
        $region21: #{tpu_custom_call.1} parent=11 // pred_check
          %p279 = pneg %p148
        $region22: #{tpu_custom_call.1} parent=11 // pred_check_branch
          %281 = sbr.rel (%p279) target = $region24
        $region23: #{tpu_custom_call.1} parent=11 // pred_region
          %s282 = sld [smem:[#allocation3]]
          %s284 = ssub.s32 3072, 3072
          %285 = vsyncadd [#allocation8], %s284
          %s286 = smul.addr %s282, 48
          %s287 = smul.addr %s286, 64
          %s288 = scalar_lea.hbm %s5, %s287
          %s289 = sshll.u32 [#allocation9], 4
          %s290 = int_to_ptr.vmem [resolvable:$true] %s289
          %295 = dma.hbm_to_vmem [thread:$0]  %s288, 3072, %s290, [#allocation8], 192, 192, 12
        $region24: #{tpu_custom_call.1} parent=11 // pred_fallthru
          _
        // Predicated region
        $region25: #{tpu_custom_call.1} parent=11 // pred_check
          %p296 = pneg %p176
        $region26: #{tpu_custom_call.1} parent=11 // pred_check_branch
          %298 = sbr.rel (%p296) target = $region28
        $region27: #{tpu_custom_call.1} parent=11 // pred_region
          %s299 = sld [smem:[#allocation3]]
          %p300 = scmp.lt.s32.totalorder %s299, 1
          %s301 = scalar_select %p300, %s299, 1
          %s302 = smul.addr %s301, 3
          %s303 = scalar_lea.vmem %s6, %s302
          %s304 = sld [smem:[#allocation3]]
        $region28: #{tpu_custom_call.1} parent=11 // pred_fallthru
          _
        // Predicated region
        $region29: #{tpu_custom_call.1} parent=11 // pred_check
          %p305 = pneg %p204
        $region30: #{tpu_custom_call.1} parent=11 // pred_check_branch
          %307 = sbr.rel (%p305) target = $region32
        $region31: #{tpu_custom_call.1} parent=11 // pred_region
          %s308 = sld [smem:[#allocation3]]
          %s310 = ssub.s32 1024, 1024
          %311 = vsyncadd [#allocation11], %s310
          %s312 = smul.addr %s308, 16
          %s313 = smul.addr %s312, 64
          %s314 = scalar_lea.hbm %s7, %s313
          %s315 = sshll.u32 [#allocation10], 4
          %s316 = int_to_ptr.vmem [resolvable:$true] %s315
          %321 = dma.hbm_to_vmem [thread:$0]  %s314, 1024, %s316, [#allocation11], 64, 64, 4
        $region32: #{tpu_custom_call.1} parent=11 // pred_fallthru
          _
        // Predicated region
        $region33: #{tpu_custom_call.1} parent=11 // pred_check
          %p322 = pneg %p232
        $region34: #{tpu_custom_call.1} parent=11 // pred_check_branch
          %324 = sbr.rel (%p322) target = $region36
        $region35: #{tpu_custom_call.1} parent=11 // pred_region
          %s325 = sld [smem:[#allocation3]]
          %p326 = scmp.lt.s32.totalorder %s325, 1
          %s327 = scalar_select %p326, %s325, 1
          %s328 = scalar_lea.vmem %s8, %s327
          %s329 = sld [smem:[#allocation3]]
        $region36: #{tpu_custom_call.1} parent=11 // pred_fallthru
          _
      $region12: #{tpu_custom_call.1} parent=5 // pred_fallthru
        _
      %p330 = scmp.lt.s32.totalorder %s26, 2
      // Predicated region
      $region37: #{tpu_custom_call.1} parent=5 // pred_check
        %p331 = pneg %p330
      $region38: #{tpu_custom_call.1} parent=5 // pred_check_branch
        %333 = sbr.rel (%p331) target = $region40
      $region39: #{tpu_custom_call.1} parent=5 // pred_region
        // Predicated region
        $region41: #{tpu_custom_call.1} parent=39 // pred_check
          %p334 = pneg %p46
        $region42: #{tpu_custom_call.1} parent=39 // pred_check_branch
          %336 = sbr.rel (%p334) target = $region44
        $region43: #{tpu_custom_call.1} parent=39 // pred_region
          %s337 = sand.u32 %s36, 1
          %s338 = scalar_lea.sflag [#allocation5], %s337
          %s339 = sand.u32 %s36, 1
          %s340 = smul.addr %s339, 8
          %s341 = scalar_lea.vmem [#allocation4], %s340
          %s343 = ssub.s32 128, 128
          %344 = vsyncadd %s338, %s343
          %s345 = smul.addr %s26, 128
          %s346 = scalar_lea.hbm %s1, %s345
          %s348 = sshll.u32 %s341, 4
          %s349 = int_to_ptr.vmem [resolvable:$true] %s348
          %351 = dma.hbm_to_vmem [thread:$0]  %s346, 128, %s349, %s338
        $region44: #{tpu_custom_call.1} parent=39 // pred_fallthru
          _
        // Predicated region
        $region45: #{tpu_custom_call.1} parent=39 // pred_check
          %p352 = pneg %p72
        $region46: #{tpu_custom_call.1} parent=39 // pred_check_branch
          %354 = sbr.rel (%p352) target = $region48
        $region47: #{tpu_custom_call.1} parent=39 // pred_region
          %s355 = sand.u32 %s26, 1
          %s356 = scalar_lea.sflag [#allocation8], %s355
          %s357 = sand.u32 %s62, 1
          %s358 = smul.addr %s357, 4
          %s359 = scalar_lea.vmem [#allocation7], %s358
          %s361 = ssub.s32 64, 64
          %362 = vsyncadd %s356, %s361
          %s363 = smul.addr %s26, 64
          %s364 = scalar_lea.hbm %s2, %s363
          %s366 = sshll.u32 %s359, 4
          %s367 = int_to_ptr.vmem [resolvable:$true] %s366
          %369 = dma.hbm_to_vmem [thread:$0]  %s364, 64, %s367, %s356
        $region48: #{tpu_custom_call.1} parent=39 // pred_fallthru
          _
      $region40: #{tpu_custom_call.1} parent=5 // pred_fallthru
        _
      %p370 = scmp.le.s32.totalorder 1, %s26
      %p371 = scmp.lt.s32.totalorder %s26, 3
      %p372 = pnand %p370, %p371
      %p373 = pneg %p372
      // Predicated region
      $region49: #{tpu_custom_call.1} parent=5 // pred_check
        _
      $region50: #{tpu_custom_call.1} parent=5 // pred_check_branch
        %375 = sbr.rel (%p372) target = $region52
      $region51: #{tpu_custom_call.1} parent=5 // pred_region
        %s376 = ssub.s32 %s26, 1
        %s377 = sand.u32 %s39, 1
        %s378 = scalar_lea.sflag [#allocation5], %s377
        %s379 = sand.u32 %s39, 1
        %s380 = smul.addr %s379, 8
        %s381 = scalar_lea.vmem [#allocation4], %s380
        // Predicated region
        $region53: #{tpu_custom_call.1} parent=51 // pred_check
          %p382 = pneg %p52
        $region54: #{tpu_custom_call.1} parent=51 // pred_check_branch
          %384 = sbr.rel (%p382) target = $region56
        $region55: #{tpu_custom_call.1} parent=51 // pred_region
          %385 = dma.done %s378, 128
        $region56: #{tpu_custom_call.1} parent=51 // pred_fallthru
          _
        %s386 = sand.u32 %s31, 1
        %s387 = scalar_lea.sflag [#allocation8], %s386
        %s388 = sand.u32 %s65, 1
        %s389 = smul.addr %s388, 4
        %s390 = scalar_lea.vmem [#allocation7], %s389
        // Predicated region
        $region57: #{tpu_custom_call.1} parent=51 // pred_check
          %p391 = pneg %p78
        $region58: #{tpu_custom_call.1} parent=51 // pred_check_branch
          %393 = sbr.rel (%p391) target = $region60
        $region59: #{tpu_custom_call.1} parent=51 // pred_region
          %394 = dma.done %s387, 64
        $region60: #{tpu_custom_call.1} parent=51 // pred_fallthru
          _
        // Predicated region
        $region61: #{tpu_custom_call.1} parent=51 // pred_check
          %p395 = pneg %p148
        $region62: #{tpu_custom_call.1} parent=51 // pred_check_branch
          %397 = sbr.rel (%p395) target = $region64
        $region63: #{tpu_custom_call.1} parent=51 // pred_region
          %398 = dma.done [#allocation8], 3072
        $region64: #{tpu_custom_call.1} parent=51 // pred_fallthru
          _
        // Predicated region
        $region65: #{tpu_custom_call.1} parent=51 // pred_check
          %p399 = pneg %p204
        $region66: #{tpu_custom_call.1} parent=51 // pred_check_branch
          %401 = sbr.rel (%p399) target = $region68
        $region67: #{tpu_custom_call.1} parent=51 // pred_region
          %402 = dma.done [#allocation11], 1024
        $region68: #{tpu_custom_call.1} parent=51 // pred_fallthru
          _
        %s403 = sand.u32 %s39, 1
        %s404 = scalar_lea.sflag [#allocation5], %s403
        %s405 = sand.u32 %s39, 1
        %s406 = smul.addr %s405, 8
        %s407 = scalar_lea.vmem [#allocation4], %s406
        %p408 = pneg %p52
        %p409 = pneg %p49
        %s410 = sand.u32 %s31, 1
        %s411 = scalar_lea.sflag [#allocation8], %s410
        %s412 = sand.u32 %s65, 1
        %s413 = smul.addr %s412, 4
        %s414 = scalar_lea.vmem [#allocation7], %s413
        %p415 = pneg %p78
        %p416 = pneg %p75
        %p417 = pneg %p99
        %p418 = pneg %p96
        %p419 = pneg %p120
        %p420 = pneg %p117
        %p421 = pneg %p148
        %p422 = pneg %p145
        %s423 = sld [smem:[#allocation3]]
        %p424 = scmp.lt.s32.totalorder %s423, 1
        %s425 = scalar_select %p424, %s423, 1
        %s426 = smul.addr %s425, 3
        %s427 = scalar_lea.vmem %s6, %s426
        %p428 = pneg %p176
        %p429 = pneg %p173
        %p430 = pneg %p204
        %p431 = pneg %p201
        %s432 = sld [smem:[#allocation3]]
        %p433 = scmp.lt.s32.totalorder %s432, 1
        %s434 = scalar_select %p433, %s432, 1
        %s435 = scalar_lea.vmem %s8, %s434
        %p436 = pneg %p232
        %p437 = pneg %p229
        %p438 = pneg %p258
        %p439 = pneg %p255
        %s440 = sand.u32 %s245, 1
        %s441 = scalar_lea.sflag [#allocation6], %s440
        %s442 = sand.u32 %s245, 1
        %s443 = smul.addr %s442, 8
        %s444 = scalar_lea.vmem [#allocation12], %s443
        %s445 = sld [smem:[#allocation3]]
        %s446 = sld [smem:[#allocation3]]
        %p447 = scmp.lt.s32.totalorder %s446, 1
        %s448 = scalar_select %p447, %s446, 1
        %s449 = smul.addr %s448, 3
        %s450 = scalar_lea.vmem %s6, %s449
        %s451 = sld [smem:[#allocation3]]
        %s452 = sld [smem:[#allocation3]]
        %s453 = sld [smem:[#allocation3]]
        %p454 = scmp.lt.s32.totalorder %s453, 1
        %s455 = scalar_select %p454, %s453, 1
        %s456 = scalar_lea.vmem %s8, %s455
        %s457 = sld [smem:[#allocation3]]
        %v459 = vld [vmem:[%s381] sm:$0xff]
        %v460 = vld [vmem:[%s3] sm:$0x1]
        %v461 = vld [vmem:[%s4] sm:$0x1]
        %462 = vadd.xlane.f32.xlu0 %v459
        %v463 = vpop.xlane.xlu0 %462
        %v464 = vrcp.pop 128.0
        %v465 = vmul.f32 %v463, %v464
        %v466 = vsub.f32 %v459, %v465
        %v467 = vmul.f32 %v466, %v466
        %468 = vadd.xlane.f32.xlu0 %v467
        %v469 = vpop.xlane.xlu0 %468
        %v470 = vmul.f32 %v469, %v464
        %v471 = vadd.f32 %v470, 1e-05
        %v472 = vrsqrt.pop %v471
        %v473 = vmul.f32 %v466, %v472
        %v475 = vlaneseq
        %v476 = vshrl.u32 %v475, 7
        %v477 = vsub.s32 0, %v476
        %v478 = vrot.slane %v460, %v477
        %v480 = vmul.f32 %v473, %v478
        %v482 = vlaneseq
        %v483 = vshrl.u32 %v482, 7
        %v484 = vsub.s32 0, %v483
        %v485 = vrot.slane %v461, %v484
        %v487 = vadd.f32 %v480, %v485
        %v488 = vpack.c.bf16 %v487, %v487
        %v489 = vld [vmem:[#allocation9] sm:$0xff]
        %v490 = vld [vmem:[#allocation9 + $0x8] sm:$0xf]
        %v491 = vld [vmem:[#allocation9 + $0xc] sm:$0xff]
        %v492 = vld [vmem:[#allocation9 + $0x14] sm:$0xf]
        %v493 = vld [vmem:[#allocation9 + $0x18] sm:$0xff]
        %v494 = vld [vmem:[#allocation9 + $0x20] sm:$0xf]
        %v495 = vld [vmem:[#allocation9 + $0x24] sm:$0xff]
        %v496 = vld [vmem:[#allocation9 + $0x2c] sm:$0xf]
        %v497 = vld [vmem:[#allocation9 + $0x30] sm:$0xff]
        %v498 = vld [vmem:[#allocation9 + $0x38] sm:$0xf]
        %v499 = vld [vmem:[#allocation9 + $0x3c] sm:$0xff]
        %v500 = vld [vmem:[#allocation9 + $0x44] sm:$0xf]
        %v501 = vld [vmem:[#allocation9 + $0x48] sm:$0xff]
        %v502 = vld [vmem:[#allocation9 + $0x50] sm:$0xf]
        %v503 = vld [vmem:[#allocation9 + $0x54] sm:$0xff]
        %v504 = vld [vmem:[#allocation9 + $0x5c] sm:$0xf]
        %v505 = vld [vmem:[#allocation9 + $0x60] sm:$0xff]
        %v506 = vld [vmem:[#allocation9 + $0x68] sm:$0xf]
        %v507 = vld [vmem:[#allocation9 + $0x6c] sm:$0xff]
        %v508 = vld [vmem:[#allocation9 + $0x74] sm:$0xf]
        %v509 = vld [vmem:[#allocation9 + $0x78] sm:$0xff]
        %v510 = vld [vmem:[#allocation9 + $0x80] sm:$0xf]
        %v511 = vld [vmem:[#allocation9 + $0x84] sm:$0xff]
        %v512 = vld [vmem:[#allocation9 + $0x8c] sm:$0xf]
        %v513 = vld [vmem:[#allocation9 + $0x90] sm:$0xff]
        %v514 = vld [vmem:[#allocation9 + $0x98] sm:$0xf]
        %v515 = vld [vmem:[#allocation9 + $0x9c] sm:$0xff]
        %v516 = vld [vmem:[#allocation9 + $0xa4] sm:$0xf]
        %v517 = vld [vmem:[#allocation9 + $0xa8] sm:$0xff]
        %v518 = vld [vmem:[#allocation9 + $0xb0] sm:$0xf]
        %v519 = vld [vmem:[#allocation9 + $0xb4] sm:$0xff]
        %v520 = vld [vmem:[#allocation9 + $0xbc] sm:$0xf]
        %v521 = vld [vmem:[%s450] sm:$0x7]
        %v523 = vlaneseq
        %v524 = vshrl.u32 %v523, 7
        %v525 = vsub.s32 0, %v524
        %v526 = vrot.slane %v521, %v525
        %v527 = vlaneseq
        %v528 = vshrl.u32 %v527, 7
        %v529 = vsub.s32 1, %v528
        %v530 = vrot.slane %v521, %v529
        %v531 = vlaneseq
        %v532 = vshrl.u32 %v531, 7
        %v533 = vsub.s32 2, %v532
        %v534 = vrot.slane %v521, %v533
        %v570 = vunpack.c.l.b16 %v489
        %v571 = vunpack.c.h.b16 %v489
        %v572 = vunpack.c.l.b16 %v490
        %v573 = vunpack.c.l.b16 %v491
        %v574 = vunpack.c.h.b16 %v491
        %v575 = vunpack.c.l.b16 %v492
        %v576 = vunpack.c.l.b16 %v493
        %v577 = vunpack.c.h.b16 %v493
        %v578 = vunpack.c.l.b16 %v494
        %v579 = vunpack.c.l.b16 %v495
        %v580 = vunpack.c.h.b16 %v495
        %v581 = vunpack.c.l.b16 %v496
        %v582 = vunpack.c.l.b16 %v497
        %v583 = vunpack.c.h.b16 %v497
        %v584 = vunpack.c.l.b16 %v498
        %v585 = vunpack.c.l.b16 %v499
        %v586 = vunpack.c.h.b16 %v499
        %v587 = vunpack.c.l.b16 %v500
        %v588 = vunpack.c.l.b16 %v501
        %v589 = vunpack.c.h.b16 %v501
        %v590 = vunpack.c.l.b16 %v502
        %v591 = vunpack.c.l.b16 %v503
        %v592 = vunpack.c.h.b16 %v503
        %v593 = vunpack.c.l.b16 %v504
        %v594 = vunpack.c.l.b16 %v505
        %v595 = vunpack.c.h.b16 %v505
        %v596 = vunpack.c.l.b16 %v506
        %v597 = vunpack.c.l.b16 %v507
        %v598 = vunpack.c.h.b16 %v507
        %v599 = vunpack.c.l.b16 %v508
        %v600 = vunpack.c.l.b16 %v509
        %v601 = vunpack.c.h.b16 %v509
        %v602 = vunpack.c.l.b16 %v510
        %v603 = vunpack.c.l.b16 %v511
        %v604 = vunpack.c.h.b16 %v511
        %v605 = vunpack.c.l.b16 %v512
        %v606 = vunpack.c.l.b16 %v513
        %v607 = vunpack.c.h.b16 %v513
        %v608 = vunpack.c.l.b16 %v514
        %v609 = vunpack.c.l.b16 %v515
        %v610 = vunpack.c.h.b16 %v515
        %v611 = vunpack.c.l.b16 %v516
        %v612 = vunpack.c.l.b16 %v517
        %v613 = vunpack.c.h.b16 %v517
        %v614 = vunpack.c.l.b16 %v518
        %v615 = vunpack.c.l.b16 %v519
        %v616 = vunpack.c.h.b16 %v519
        %v617 = vunpack.c.l.b16 %v520
        %v618 = vpack.c.b16 %v573, %v570
        %v619 = vpack.c.b16 %v574, %v571
        %v620 = vpack.c.b16 %v575, %v572
        %v621 = vpack.c.b16 %v579, %v576
        %v622 = vpack.c.b16 %v580, %v577
        %v623 = vpack.c.b16 %v581, %v578
        %v624 = vpack.c.b16 %v585, %v582
        %v625 = vpack.c.b16 %v586, %v583
        %v626 = vpack.c.b16 %v587, %v584
        %v627 = vpack.c.b16 %v591, %v588
        %v628 = vpack.c.b16 %v592, %v589
        %v629 = vpack.c.b16 %v593, %v590
        %v630 = vpack.c.b16 %v597, %v594
        %v631 = vpack.c.b16 %v598, %v595
        %v632 = vpack.c.b16 %v599, %v596
        %v633 = vpack.c.b16 %v603, %v600
        %v634 = vpack.c.b16 %v604, %v601
        %v635 = vpack.c.b16 %v605, %v602
        %v636 = vpack.c.b16 %v609, %v606
        %v637 = vpack.c.b16 %v610, %v607
        %v638 = vpack.c.b16 %v611, %v608
        %v639 = vpack.c.b16 %v615, %v612
        %v640 = vpack.c.b16 %v616, %v613
        %v641 = vpack.c.b16 %v617, %v614
        %666 = vmatprep.subr.bf16.mxu0 %v619
        %667 = vmatpush1.bf16.msra.mxu0 %v618
        %668 = vmatprep.subr.bf16.mxu0 %v622
        %669 = vmatpush1.bf16.msra.mxu0 %v621
        %670 = vmatprep.subr.bf16.mxu0 %v625
        %671 = vmatpush1.bf16.msra.mxu0 %v624
        %672 = vmatprep.subr.bf16.mxu0 %v628
        %673 = vmatpush1.bf16.msra.mxu0 %v627
        %674 = vmatprep.subr.bf16.mxu0 %v631
        %675 = vmatpush1.bf16.msra.mxu0 %v630
        %676 = vmatprep.subr.bf16.mxu0 %v634
        %677 = vmatpush1.bf16.msra.mxu0 %v633
        %678 = vmatprep.subr.bf16.mxu0 %v637
        %679 = vmatpush1.bf16.msra.mxu0 %v636
        %680 = vmatprep.subr.bf16.mxu0 %v640
        %681 = vmatpush1.bf16.msra.mxu0 %v639
        %682 = vmatprep.subr.bf16.mxu0 0
        %683 = vmatpush1.bf16.msra.mxu0 0
        %684 = vmatprep.subr.bf16.mxu0 0
        %685 = vmatpush1.bf16.msra.mxu0 0
        %686 = vmatprep.subr.bf16.mxu0 0
        %687 = vmatpush1.bf16.msra.mxu0 0
        %688 = vmatprep.subr.bf16.mxu0 0
        %689 = vmatpush1.bf16.msra.mxu0 0
        %690 = vmatprep.subr.bf16.mxu0 0
        %691 = vmatpush1.bf16.msra.mxu0 0
        %692 = vmatprep.subr.bf16.mxu0 0
        %693 = vmatpush1.bf16.msra.mxu0 0
        %694 = vmatprep.subr.bf16.mxu0 0
        %695 = vmatpush1.bf16.msra.mxu0 0
        %696 = vmatprep.subr.bf16.mxu0 0
        %697 = vmatpush1.bf16.msra.mxu0 0
        %698 = vmatprep.mubr.bf16.mxu0 0
        %699 = vmatmul.mubr.bf16.gmra.mrb[0].mxu0 %v488
        %v700 = vpop.f32.mrb[0].mxu0
        %v701 = vadd.f32 %v526, %v700
        %v702 = vpop.f32.mrb[0].mxu0
        %v703 = vadd.f32 %v530, %v702
        %v704 = vpop.f32.mrb[0].mxu0
        %v705 = vpop.f32.mrb[0].mxu0
        %706 = vdwg.mxu0
        %707 = vmatprep.subr.bf16.mxu0 0
        %708 = vmatpush1.bf16.msra.mxu0 %v620
        %709 = vmatprep.subr.bf16.mxu0 0
        %710 = vmatpush1.bf16.msra.mxu0 %v623
        %711 = vmatprep.subr.bf16.mxu0 0
        %712 = vmatpush1.bf16.msra.mxu0 %v626
        %713 = vmatprep.subr.bf16.mxu0 0
        %714 = vmatpush1.bf16.msra.mxu0 %v629
        %715 = vmatprep.subr.bf16.mxu0 0
        %716 = vmatpush1.bf16.msra.mxu0 %v632
        %717 = vmatprep.subr.bf16.mxu0 0
        %718 = vmatpush1.bf16.msra.mxu0 %v635
        %719 = vmatprep.subr.bf16.mxu0 0
        %720 = vmatpush1.bf16.msra.mxu0 %v638
        %721 = vmatprep.subr.bf16.mxu0 0
        %722 = vmatpush1.bf16.msra.mxu0 %v641
        %723 = vmatprep.subr.bf16.mxu0 0
        %724 = vmatpush1.bf16.msra.mxu0 0
        %725 = vmatprep.subr.bf16.mxu0 0
        %726 = vmatpush1.bf16.msra.mxu0 0
        %727 = vmatprep.subr.bf16.mxu0 0
        %728 = vmatpush1.bf16.msra.mxu0 0
        %729 = vmatprep.subr.bf16.mxu0 0
        %730 = vmatpush1.bf16.msra.mxu0 0
        %731 = vmatprep.subr.bf16.mxu0 0
        %732 = vmatpush1.bf16.msra.mxu0 0
        %733 = vmatprep.subr.bf16.mxu0 0
        %734 = vmatpush1.bf16.msra.mxu0 0
        %735 = vmatprep.subr.bf16.mxu0 0
        %736 = vmatpush1.bf16.msra.mxu0 0
        %737 = vmatprep.subr.bf16.mxu0 0
        %738 = vmatpush1.bf16.msra.mxu0 0
        %739 = vmatprep.mubr.bf16.mxu0 0
        %740 = vmatmul.mubr.bf16.gmra.mrb[0].mxu0 %v488
        %v741 = vpop.f32.mrb[0].mxu0
        %v742 = vadd.f32 %v534, %v741
        %v743 = vpop.f32.mrb[0].mxu0
        %v744 = vpop.f32.mrb[0].mxu0
        %v745 = vpop.f32.mrb[0].mxu0
        %746 = vdwg.mxu0
        %v747 = vmul.f32 %v701, 0.17677669
        %v748 = vpack.c.bf16 %v747, %v747
        %v749 = vpack.c.bf16 %v703, %v703
        %v750 = vpack.c.bf16 %v742, %v742
        %v751 = vld [vmem:[%s390] sm:$0xf]
        %v752 = vunpack.c.l.bf16 %v751
        %vm753 = vcmask 261120
        %v755 = vsel %vm753, %v748, 0
        %v758 = vsel %vm753, %v749, 0
        %760 = vmatprep.subr.bf16.mxu0 0
        %761 = vmatpush1.bf16.xpose.msra.mxu0 %v758
        %762 = vmatprep.subr.bf16.mxu0 0
        %763 = vmatpush1.bf16.xpose.msra.mxu0 0
        %764 = vmatprep.subr.bf16.mxu0 0
        %765 = vmatpush1.bf16.xpose.msra.mxu0 0
        %766 = vmatprep.subr.bf16.mxu0 0
        %767 = vmatpush1.bf16.xpose.msra.mxu0 0
        %768 = vmatprep.subr.bf16.mxu0 0
        %769 = vmatpush1.bf16.xpose.msra.mxu0 0
        %770 = vmatprep.subr.bf16.mxu0 0
        %771 = vmatpush1.bf16.xpose.msra.mxu0 0
        %772 = vmatprep.subr.bf16.mxu0 0
        %773 = vmatpush1.bf16.xpose.msra.mxu0 0
        %774 = vmatprep.subr.bf16.mxu0 0
        %775 = vmatpush1.bf16.xpose.msra.mxu0 0
        %776 = vmatprep.subr.bf16.mxu0 0
        %777 = vmatpush1.bf16.xpose.msra.mxu0 0
        %778 = vmatprep.subr.bf16.mxu0 0
        %779 = vmatpush1.bf16.xpose.msra.mxu0 0
        %780 = vmatprep.subr.bf16.mxu0 0
        %781 = vmatpush1.bf16.xpose.msra.mxu0 0
        %782 = vmatprep.subr.bf16.mxu0 0
        %783 = vmatpush1.bf16.xpose.msra.mxu0 0
        %784 = vmatprep.subr.bf16.mxu0 0
        %785 = vmatpush1.bf16.xpose.msra.mxu0 0
        %786 = vmatprep.subr.bf16.mxu0 0
        %787 = vmatpush1.bf16.xpose.msra.mxu0 0
        %788 = vmatprep.subr.bf16.mxu0 0
        %789 = vmatpush1.bf16.xpose.msra.mxu0 0
        %790 = vmatprep.subr.bf16.mxu0 0
        %791 = vmatpush1.bf16.xpose.msra.mxu0 0
        %792 = vmatprep.mubr.bf16.mxu0 0
        %793 = vmatmul.mubr.bf16.gmra.mrb[0].mxu0 %v755
        %v794 = vpop.f32.mrb[0].mxu0
        %v795 = vadd.f32 %v752, %v794
        %v796 = vpop.f32.mrb[0].mxu0
        %v797 = vpop.f32.mrb[0].mxu0
        %v798 = vpop.f32.mrb[0].mxu0
        %799 = vdwg.mxu0
        %vm800 = vcmask 64512
        %v801 = vsel %vm800, %v795, -inf
        %802 = vmax.xlane.f32.xlu0 %v801
        %v803 = vpop.xlane.xlu0 %802
        %v804 = vsub.f32 %v795, %v803
        %v805 = vmul.f32 %v804, 1.442695
        %v806 = vpow.pop %v805
        %v807 = vsel %vm800, %v806, 0.0
        %808 = vadd.xlane.f32.xlu0 %v807
        %v809 = vpop.xlane.xlu0 %808
        %v810 = vrcp.pop %v809
        %v811 = vmul.f32 %v806, %v810
        %v812 = vpack.c.bf16 %v811, %v811
        %v814 = vsel %vm800, %v812, 0
        %vm816 = vcmask 1043456
        %v818 = vsel %vm816, %v750, 0
        %820 = vmatprep.subr.bf16.mxu0 0
        %821 = vmatpush1.bf16.msra.mxu0 %v818
        %822 = vmatprep.subr.bf16.mxu0 0
        %823 = vmatpush1.bf16.msra.mxu0 0
        %824 = vmatprep.subr.bf16.mxu0 0
        %825 = vmatpush1.bf16.msra.mxu0 0
        %826 = vmatprep.subr.bf16.mxu0 0
        %827 = vmatpush1.bf16.msra.mxu0 0
        %828 = vmatprep.subr.bf16.mxu0 0
        %829 = vmatpush1.bf16.msra.mxu0 0
        %830 = vmatprep.subr.bf16.mxu0 0
        %831 = vmatpush1.bf16.msra.mxu0 0
        %832 = vmatprep.subr.bf16.mxu0 0
        %833 = vmatpush1.bf16.msra.mxu0 0
        %834 = vmatprep.subr.bf16.mxu0 0
        %835 = vmatpush1.bf16.msra.mxu0 0
        %836 = vmatprep.subr.bf16.mxu0 0
        %837 = vmatpush1.bf16.msra.mxu0 0
        %838 = vmatprep.subr.bf16.mxu0 0
        %839 = vmatpush1.bf16.msra.mxu0 0
        %840 = vmatprep.subr.bf16.mxu0 0
        %841 = vmatpush1.bf16.msra.mxu0 0
        %842 = vmatprep.subr.bf16.mxu0 0
        %843 = vmatpush1.bf16.msra.mxu0 0
        %844 = vmatprep.subr.bf16.mxu0 0
        %845 = vmatpush1.bf16.msra.mxu0 0
        %846 = vmatprep.subr.bf16.mxu0 0
        %847 = vmatpush1.bf16.msra.mxu0 0
        %848 = vmatprep.subr.bf16.mxu0 0
        %849 = vmatpush1.bf16.msra.mxu0 0
        %850 = vmatprep.subr.bf16.mxu0 0
        %851 = vmatpush1.bf16.msra.mxu0 0
        %852 = vmatprep.mubr.bf16.mxu0 0
        %853 = vmatmul.mubr.bf16.gmra.mrb[0].mxu0 %v814
        %v854 = vpop.f32.mrb[0].mxu0
        %v855 = vadd.f32 0.0, %v854
        %v856 = vpop.f32.mrb[0].mxu0
        %v857 = vpop.f32.mrb[0].mxu0
        %v858 = vpop.f32.mrb[0].mxu0
        %859 = vdwg.mxu0
        %861 = vrot.lane.b32.xlu0 %v748, 96
        %v862 = vpop.permute.xlu0 %861
        %864 = vrot.lane.b32.xlu0 %v749, 96
        %v865 = vpop.permute.xlu0 %864
        %v867 = vsel %vm753, %v862, 0
        %v870 = vsel %vm753, %v865, 0
        %872 = vmatprep.subr.bf16.mxu0 0
        %873 = vmatpush1.bf16.xpose.msra.mxu0 %v870
        %874 = vmatprep.subr.bf16.mxu0 0
        %875 = vmatpush1.bf16.xpose.msra.mxu0 0
        %876 = vmatprep.subr.bf16.mxu0 0
        %877 = vmatpush1.bf16.xpose.msra.mxu0 0
        %878 = vmatprep.subr.bf16.mxu0 0
        %879 = vmatpush1.bf16.xpose.msra.mxu0 0
        %880 = vmatprep.subr.bf16.mxu0 0
        %881 = vmatpush1.bf16.xpose.msra.mxu0 0
        %882 = vmatprep.subr.bf16.mxu0 0
        %883 = vmatpush1.bf16.xpose.msra.mxu0 0
        %884 = vmatprep.subr.bf16.mxu0 0
        %885 = vmatpush1.bf16.xpose.msra.mxu0 0
        %886 = vmatprep.subr.bf16.mxu0 0
        %887 = vmatpush1.bf16.xpose.msra.mxu0 0
        %888 = vmatprep.subr.bf16.mxu0 0
        %889 = vmatpush1.bf16.xpose.msra.mxu0 0
        %890 = vmatprep.subr.bf16.mxu0 0
        %891 = vmatpush1.bf16.xpose.msra.mxu0 0
        %892 = vmatprep.subr.bf16.mxu0 0
        %893 = vmatpush1.bf16.xpose.msra.mxu0 0
        %894 = vmatprep.subr.bf16.mxu0 0
        %895 = vmatpush1.bf16.xpose.msra.mxu0 0
        %896 = vmatprep.subr.bf16.mxu0 0
        %897 = vmatpush1.bf16.xpose.msra.mxu0 0
        %898 = vmatprep.subr.bf16.mxu0 0
        %899 = vmatpush1.bf16.xpose.msra.mxu0 0
        %900 = vmatprep.subr.bf16.mxu0 0
        %901 = vmatpush1.bf16.xpose.msra.mxu0 0
        %902 = vmatprep.subr.bf16.mxu0 0
        %903 = vmatpush1.bf16.xpose.msra.mxu0 0
        %904 = vmatprep.mubr.bf16.mxu0 0
        %905 = vmatmul.mubr.bf16.gmra.mrb[0].mxu0 %v867
        %v906 = vpop.f32.mrb[0].mxu0
        %v907 = vadd.f32 %v752, %v906
        %v908 = vpop.f32.mrb[0].mxu0
        %v909 = vpop.f32.mrb[0].mxu0
        %v910 = vpop.f32.mrb[0].mxu0
        %911 = vdwg.mxu0
        %v912 = vsel %vm800, %v907, -inf
        %913 = vmax.xlane.f32.xlu0 %v912
        %v914 = vpop.xlane.xlu0 %913
        %v915 = vsub.f32 %v907, %v914
        %v916 = vmul.f32 %v915, 1.442695
        %v917 = vpow.pop %v916
        %v918 = vsel %vm800, %v917, 0.0
        %919 = vadd.xlane.f32.xlu0 %v918
        %v920 = vpop.xlane.xlu0 %919
        %v921 = vrcp.pop %v920
        %v922 = vmul.f32 %v917, %v921
        %v923 = vpack.c.bf16 %v922, %v922
        %925 = vrot.lane.b32.xlu0 %v750, 96
        %v926 = vpop.permute.xlu0 %925
        %v928 = vsel %vm800, %v923, 0
        %v931 = vsel %vm816, %v926, 0
        %933 = vmatprep.subr.bf16.mxu0 0
        %934 = vmatpush1.bf16.msra.mxu0 %v931
        %935 = vmatprep.subr.bf16.mxu0 0
        %936 = vmatpush1.bf16.msra.mxu0 0
        %937 = vmatprep.subr.bf16.mxu0 0
        %938 = vmatpush1.bf16.msra.mxu0 0
        %939 = vmatprep.subr.bf16.mxu0 0
        %940 = vmatpush1.bf16.msra.mxu0 0
        %941 = vmatprep.subr.bf16.mxu0 0
        %942 = vmatpush1.bf16.msra.mxu0 0
        %943 = vmatprep.subr.bf16.mxu0 0
        %944 = vmatpush1.bf16.msra.mxu0 0
        %945 = vmatprep.subr.bf16.mxu0 0
        %946 = vmatpush1.bf16.msra.mxu0 0
        %947 = vmatprep.subr.bf16.mxu0 0
        %948 = vmatpush1.bf16.msra.mxu0 0
        %949 = vmatprep.subr.bf16.mxu0 0
        %950 = vmatpush1.bf16.msra.mxu0 0
        %951 = vmatprep.subr.bf16.mxu0 0
        %952 = vmatpush1.bf16.msra.mxu0 0
        %953 = vmatprep.subr.bf16.mxu0 0
        %954 = vmatpush1.bf16.msra.mxu0 0
        %955 = vmatprep.subr.bf16.mxu0 0
        %956 = vmatpush1.bf16.msra.mxu0 0
        %957 = vmatprep.subr.bf16.mxu0 0
        %958 = vmatpush1.bf16.msra.mxu0 0
        %959 = vmatprep.subr.bf16.mxu0 0
        %960 = vmatpush1.bf16.msra.mxu0 0
        %961 = vmatprep.subr.bf16.mxu0 0
        %962 = vmatpush1.bf16.msra.mxu0 0
        %963 = vmatprep.subr.bf16.mxu0 0
        %964 = vmatpush1.bf16.msra.mxu0 0
        %965 = vmatprep.mubr.bf16.mxu0 0
        %966 = vmatmul.mubr.bf16.gmra.mrb[0].mxu0 %v928
        %v967 = vpop.f32.mrb[0].mxu0
        %v968 = vadd.f32 0.0, %v967
        %v969 = vpop.f32.mrb[0].mxu0
        %v970 = vpop.f32.mrb[0].mxu0
        %v971 = vpop.f32.mrb[0].mxu0
        %972 = vdwg.mxu0
        %973 = vrot.lane.b32.xlu0 %v748, 64
        %v974 = vpop.permute.xlu0 %973
        %975 = vrot.lane.b32.xlu0 %v749, 64
        %v976 = vpop.permute.xlu0 %975
        %v978 = vsel %vm753, %v974, 0
        %v981 = vsel %vm753, %v976, 0
        %983 = vmatprep.subr.bf16.mxu0 0
        %984 = vmatpush1.bf16.xpose.msra.mxu0 %v981
        %985 = vmatprep.subr.bf16.mxu0 0
        %986 = vmatpush1.bf16.xpose.msra.mxu0 0
        %987 = vmatprep.subr.bf16.mxu0 0
        %988 = vmatpush1.bf16.xpose.msra.mxu0 0
        %989 = vmatprep.subr.bf16.mxu0 0
        %990 = vmatpush1.bf16.xpose.msra.mxu0 0
        %991 = vmatprep.subr.bf16.mxu0 0
        %992 = vmatpush1.bf16.xpose.msra.mxu0 0
        %993 = vmatprep.subr.bf16.mxu0 0
        %994 = vmatpush1.bf16.xpose.msra.mxu0 0
        %995 = vmatprep.subr.bf16.mxu0 0
        %996 = vmatpush1.bf16.xpose.msra.mxu0 0
        %997 = vmatprep.subr.bf16.mxu0 0
        %998 = vmatpush1.bf16.xpose.msra.mxu0 0
        %999 = vmatprep.subr.bf16.mxu0 0
        %1000 = vmatpush1.bf16.xpose.msra.mxu0 0
        %1001 = vmatprep.subr.bf16.mxu0 0
        %1002 = vmatpush1.bf16.xpose.msra.mxu0 0
        %1003 = vmatprep.subr.bf16.mxu0 0
        %1004 = vmatpush1.bf16.xpose.msra.mxu0 0
        %1005 = vmatprep.subr.bf16.mxu0 0
        %1006 = vmatpush1.bf16.xpose.msra.mxu0 0
        %1007 = vmatprep.subr.bf16.mxu0 0
        %1008 = vmatpush1.bf16.xpose.msra.mxu0 0
        %1009 = vmatprep.subr.bf16.mxu0 0
        %1010 = vmatpush1.bf16.xpose.msra.mxu0 0
        %1011 = vmatprep.subr.bf16.mxu0 0
        %1012 = vmatpush1.bf16.xpose.msra.mxu0 0
        %1013 = vmatprep.subr.bf16.mxu0 0
        %1014 = vmatpush1.bf16.xpose.msra.mxu0 0
        %1015 = vmatprep.mubr.bf16.mxu0 0
        %1016 = vmatmul.mubr.bf16.gmra.mrb[0].mxu0 %v978
        %v1017 = vpop.f32.mrb[0].mxu0
        %v1018 = vadd.f32 %v752, %v1017
        %v1019 = vpop.f32.mrb[0].mxu0
        %v1020 = vpop.f32.mrb[0].mxu0
        %v1021 = vpop.f32.mrb[0].mxu0
        %1022 = vdwg.mxu0
        %v1023 = vsel %vm800, %v1018, -inf
        %1024 = vmax.xlane.f32.xlu0 %v1023
        %v1025 = vpop.xlane.xlu0 %1024
        %v1026 = vsub.f32 %v1018, %v1025
        %v1027 = vmul.f32 %v1026, 1.442695
        %v1028 = vpow.pop %v1027
        %v1029 = vsel %vm800, %v1028, 0.0
        %1030 = vadd.xlane.f32.xlu0 %v1029
        %v1031 = vpop.xlane.xlu0 %1030
        %v1032 = vrcp.pop %v1031
        %v1033 = vmul.f32 %v1028, %v1032
        %v1034 = vpack.c.bf16 %v1033, %v1033
        %1035 = vrot.lane.b32.xlu0 %v750, 64
        %v1036 = vpop.permute.xlu0 %1035
        %v1038 = vsel %vm800, %v1034, 0
        %v1041 = vsel %vm816, %v1036, 0
        %1043 = vmatprep.subr.bf16.mxu0 0
        %1044 = vmatpush1.bf16.msra.mxu0 %v1041
        %1045 = vmatprep.subr.bf16.mxu0 0
        %1046 = vmatpush1.bf16.msra.mxu0 0
        %1047 = vmatprep.subr.bf16.mxu0 0
        %1048 = vmatpush1.bf16.msra.mxu0 0
        %1049 = vmatprep.subr.bf16.mxu0 0
        %1050 = vmatpush1.bf16.msra.mxu0 0
        %1051 = vmatprep.subr.bf16.mxu0 0
        %1052 = vmatpush1.bf16.msra.mxu0 0
        %1053 = vmatprep.subr.bf16.mxu0 0
        %1054 = vmatpush1.bf16.msra.mxu0 0
        %1055 = vmatprep.subr.bf16.mxu0 0
        %1056 = vmatpush1.bf16.msra.mxu0 0
        %1057 = vmatprep.subr.bf16.mxu0 0
        %1058 = vmatpush1.bf16.msra.mxu0 0
        %1059 = vmatprep.subr.bf16.mxu0 0
        %1060 = vmatpush1.bf16.msra.mxu0 0
        %1061 = vmatprep.subr.bf16.mxu0 0
        %1062 = vmatpush1.bf16.msra.mxu0 0
        %1063 = vmatprep.subr.bf16.mxu0 0
        %1064 = vmatpush1.bf16.msra.mxu0 0
        %1065 = vmatprep.subr.bf16.mxu0 0
        %1066 = vmatpush1.bf16.msra.mxu0 0
        %1067 = vmatprep.subr.bf16.mxu0 0
        %1068 = vmatpush1.bf16.msra.mxu0 0
        %1069 = vmatprep.subr.bf16.mxu0 0
        %1070 = vmatpush1.bf16.msra.mxu0 0
        %1071 = vmatprep.subr.bf16.mxu0 0
        %1072 = vmatpush1.bf16.msra.mxu0 0
        %1073 = vmatprep.subr.bf16.mxu0 0
        %1074 = vmatpush1.bf16.msra.mxu0 0
        %1075 = vmatprep.mubr.bf16.mxu0 0
        %1076 = vmatmul.mubr.bf16.gmra.mrb[0].mxu0 %v1038
        %v1077 = vpop.f32.mrb[0].mxu0
        %v1078 = vadd.f32 0.0, %v1077
        %v1079 = vpop.f32.mrb[0].mxu0
        %v1080 = vpop.f32.mrb[0].mxu0
        %v1081 = vpop.f32.mrb[0].mxu0
        %1082 = vdwg.mxu0
        %1083 = vrot.lane.b32.xlu0 %v748, 32
        %v1084 = vpop.permute.xlu0 %1083
        %1085 = vrot.lane.b32.xlu0 %v749, 32
        %v1086 = vpop.permute.xlu0 %1085
        %v1088 = vsel %vm753, %v1084, 0
        %v1091 = vsel %vm753, %v1086, 0
        %1093 = vmatprep.subr.bf16.mxu0 0
        %1094 = vmatpush1.bf16.xpose.msra.mxu0 %v1091
        %1095 = vmatprep.subr.bf16.mxu0 0
        %1096 = vmatpush1.bf16.xpose.msra.mxu0 0
        %1097 = vmatprep.subr.bf16.mxu0 0
        %1098 = vmatpush1.bf16.xpose.msra.mxu0 0
        %1099 = vmatprep.subr.bf16.mxu0 0
        %1100 = vmatpush1.bf16.xpose.msra.mxu0 0
        %1101 = vmatprep.subr.bf16.mxu0 0
        %1102 = vmatpush1.bf16.xpose.msra.mxu0 0
        %1103 = vmatprep.subr.bf16.mxu0 0
        %1104 = vmatpush1.bf16.xpose.msra.mxu0 0
        %1105 = vmatprep.subr.bf16.mxu0 0
        %1106 = vmatpush1.bf16.xpose.msra.mxu0 0
        %1107 = vmatprep.subr.bf16.mxu0 0
        %1108 = vmatpush1.bf16.xpose.msra.mxu0 0
        %1109 = vmatprep.subr.bf16.mxu0 0
        %1110 = vmatpush1.bf16.xpose.msra.mxu0 0
        %1111 = vmatprep.subr.bf16.mxu0 0
        %1112 = vmatpush1.bf16.xpose.msra.mxu0 0
        %1113 = vmatprep.subr.bf16.mxu0 0
        %1114 = vmatpush1.bf16.xpose.msra.mxu0 0
        %1115 = vmatprep.subr.bf16.mxu0 0
        %1116 = vmatpush1.bf16.xpose.msra.mxu0 0
        %1117 = vmatprep.subr.bf16.mxu0 0
        %1118 = vmatpush1.bf16.xpose.msra.mxu0 0
        %1119 = vmatprep.subr.bf16.mxu0 0
        %1120 = vmatpush1.bf16.xpose.msra.mxu0 0
        %1121 = vmatprep.subr.bf16.mxu0 0
        %1122 = vmatpush1.bf16.xpose.msra.mxu0 0
        %1123 = vmatprep.subr.bf16.mxu0 0
        %1124 = vmatpush1.bf16.xpose.msra.mxu0 0
        %1125 = vmatprep.mubr.bf16.mxu0 0
        %1126 = vmatmul.mubr.bf16.gmra.mrb[0].mxu0 %v1088
        %v1127 = vpop.f32.mrb[0].mxu0
        %v1128 = vadd.f32 %v752, %v1127
        %v1129 = vpop.f32.mrb[0].mxu0
        %v1130 = vpop.f32.mrb[0].mxu0
        %v1131 = vpop.f32.mrb[0].mxu0
        %1132 = vdwg.mxu0
        %v1133 = vsel %vm800, %v1128, -inf
        %1134 = vmax.xlane.f32.xlu0 %v1133
        %v1135 = vpop.xlane.xlu0 %1134
        %v1136 = vsub.f32 %v1128, %v1135
        %v1137 = vmul.f32 %v1136, 1.442695
        %v1138 = vpow.pop %v1137
        %v1139 = vsel %vm800, %v1138, 0.0
        %1140 = vadd.xlane.f32.xlu0 %v1139
        %v1141 = vpop.xlane.xlu0 %1140
        %v1142 = vrcp.pop %v1141
        %v1143 = vmul.f32 %v1138, %v1142
        %v1144 = vpack.c.bf16 %v1143, %v1143
        %1145 = vrot.lane.b32.xlu0 %v750, 32
        %v1146 = vpop.permute.xlu0 %1145
        %v1148 = vsel %vm800, %v1144, 0
        %v1151 = vsel %vm816, %v1146, 0
        %1153 = vmatprep.subr.bf16.mxu0 0
        %1154 = vmatpush1.bf16.msra.mxu0 %v1151
        %1155 = vmatprep.subr.bf16.mxu0 0
        %1156 = vmatpush1.bf16.msra.mxu0 0
        %1157 = vmatprep.subr.bf16.mxu0 0
        %1158 = vmatpush1.bf16.msra.mxu0 0
        %1159 = vmatprep.subr.bf16.mxu0 0
        %1160 = vmatpush1.bf16.msra.mxu0 0
        %1161 = vmatprep.subr.bf16.mxu0 0
        %1162 = vmatpush1.bf16.msra.mxu0 0
        %1163 = vmatprep.subr.bf16.mxu0 0
        %1164 = vmatpush1.bf16.msra.mxu0 0
        %1165 = vmatprep.subr.bf16.mxu0 0
        %1166 = vmatpush1.bf16.msra.mxu0 0
        %1167 = vmatprep.subr.bf16.mxu0 0
        %1168 = vmatpush1.bf16.msra.mxu0 0
        %1169 = vmatprep.subr.bf16.mxu0 0
        %1170 = vmatpush1.bf16.msra.mxu0 0
        %1171 = vmatprep.subr.bf16.mxu0 0
        %1172 = vmatpush1.bf16.msra.mxu0 0
        %1173 = vmatprep.subr.bf16.mxu0 0
        %1174 = vmatpush1.bf16.msra.mxu0 0
        %1175 = vmatprep.subr.bf16.mxu0 0
        %1176 = vmatpush1.bf16.msra.mxu0 0
        %1177 = vmatprep.subr.bf16.mxu0 0
        %1178 = vmatpush1.bf16.msra.mxu0 0
        %1179 = vmatprep.subr.bf16.mxu0 0
        %1180 = vmatpush1.bf16.msra.mxu0 0
        %1181 = vmatprep.subr.bf16.mxu0 0
        %1182 = vmatpush1.bf16.msra.mxu0 0
        %1183 = vmatprep.subr.bf16.mxu0 0
        %1184 = vmatpush1.bf16.msra.mxu0 0
        %1185 = vmatprep.mubr.bf16.mxu0 0
        %1186 = vmatmul.mubr.bf16.gmra.mrb[0].mxu0 %v1148
        %v1187 = vpop.f32.mrb[0].mxu0
        %v1188 = vadd.f32 0.0, %v1187
        %v1189 = vpop.f32.mrb[0].mxu0
        %v1190 = vpop.f32.mrb[0].mxu0
        %v1191 = vpop.f32.mrb[0].mxu0
        %1192 = vdwg.mxu0
        %1194 = vrot.lane.b32.xlu0 %v968, 32
        %v1195 = vpop.permute.xlu0 %1194
        %1198 = vrot.lane.b32.xlu0 %v1078, 64
        %v1199 = vpop.permute.xlu0 %1198
        %1202 = vrot.lane.b32.xlu0 %v1188, 96
        %v1203 = vpop.permute.xlu0 %1202
        %v1205 = vsel %vm753, %v855, %v1195
        %vm1206 = vcmask 523264
        %v1207 = vsel %vm1206, %v1205, %v1199
        %vm1208 = vcmask 785408
        %v1209 = vsel %vm1208, %v1207, %v1203
        %v1210 = vpack.c.bf16 %v1209, %v1209
        %v1211 = vld [vmem:[#allocation10] sm:$0xf]
        %v1212 = vld [vmem:[#allocation10 + $0x4] sm:$0xf]
        %v1213 = vld [vmem:[#allocation10 + $0x8] sm:$0xf]
        %v1214 = vld [vmem:[#allocation10 + $0xc] sm:$0xf]
        %v1215 = vld [vmem:[#allocation10 + $0x10] sm:$0xf]
        %v1216 = vld [vmem:[#allocation10 + $0x14] sm:$0xf]
        %v1217 = vld [vmem:[#allocation10 + $0x18] sm:$0xf]
        %v1218 = vld [vmem:[#allocation10 + $0x1c] sm:$0xf]
        %v1219 = vld [vmem:[#allocation10 + $0x20] sm:$0xf]
        %v1220 = vld [vmem:[#allocation10 + $0x24] sm:$0xf]
        %v1221 = vld [vmem:[#allocation10 + $0x28] sm:$0xf]
        %v1222 = vld [vmem:[#allocation10 + $0x2c] sm:$0xf]
        %v1223 = vld [vmem:[#allocation10 + $0x30] sm:$0xf]
        %v1224 = vld [vmem:[#allocation10 + $0x34] sm:$0xf]
        %v1225 = vld [vmem:[#allocation10 + $0x38] sm:$0xf]
        %v1226 = vld [vmem:[#allocation10 + $0x3c] sm:$0xf]
        %v1243 = vunpack.c.l.b16 %v1211
        %v1244 = vunpack.c.l.b16 %v1212
        %v1245 = vunpack.c.l.b16 %v1213
        %v1246 = vunpack.c.l.b16 %v1214
        %v1247 = vunpack.c.l.b16 %v1215
        %v1248 = vunpack.c.l.b16 %v1216
        %v1249 = vunpack.c.l.b16 %v1217
        %v1250 = vunpack.c.l.b16 %v1218
        %v1251 = vunpack.c.l.b16 %v1219
        %v1252 = vunpack.c.l.b16 %v1220
        %v1253 = vunpack.c.l.b16 %v1221
        %v1254 = vunpack.c.l.b16 %v1222
        %v1255 = vunpack.c.l.b16 %v1223
        %v1256 = vunpack.c.l.b16 %v1224
        %v1257 = vunpack.c.l.b16 %v1225
        %v1258 = vunpack.c.l.b16 %v1226
        %v1259 = vpack.c.b16 %v1244, %v1243
        %v1260 = vpack.c.b16 %v1246, %v1245
        %v1261 = vpack.c.b16 %v1248, %v1247
        %v1262 = vpack.c.b16 %v1250, %v1249
        %v1263 = vpack.c.b16 %v1252, %v1251
        %v1264 = vpack.c.b16 %v1254, %v1253
        %v1265 = vpack.c.b16 %v1256, %v1255
        %v1266 = vpack.c.b16 %v1258, %v1257
        %1275 = vmatprep.subr.bf16.mxu0 0
        %1276 = vmatpush1.bf16.msra.mxu0 %v1259
        %1277 = vmatprep.subr.bf16.mxu0 0
        %1278 = vmatpush1.bf16.msra.mxu0 %v1260
        %1279 = vmatprep.subr.bf16.mxu0 0
        %1280 = vmatpush1.bf16.msra.mxu0 %v1261
        %1281 = vmatprep.subr.bf16.mxu0 0
        %1282 = vmatpush1.bf16.msra.mxu0 %v1262
        %1283 = vmatprep.subr.bf16.mxu0 0
        %1284 = vmatpush1.bf16.msra.mxu0 %v1263
        %1285 = vmatprep.subr.bf16.mxu0 0
        %1286 = vmatpush1.bf16.msra.mxu0 %v1264
        %1287 = vmatprep.subr.bf16.mxu0 0
        %1288 = vmatpush1.bf16.msra.mxu0 %v1265
        %1289 = vmatprep.subr.bf16.mxu0 0
        %1290 = vmatpush1.bf16.msra.mxu0 %v1266
        %1291 = vmatprep.subr.bf16.mxu0 0
        %1292 = vmatpush1.bf16.msra.mxu0 0
        %1293 = vmatprep.subr.bf16.mxu0 0
        %1294 = vmatpush1.bf16.msra.mxu0 0
        %1295 = vmatprep.subr.bf16.mxu0 0
        %1296 = vmatpush1.bf16.msra.mxu0 0
        %1297 = vmatprep.subr.bf16.mxu0 0
        %1298 = vmatpush1.bf16.msra.mxu0 0
        %1299 = vmatprep.subr.bf16.mxu0 0
        %1300 = vmatpush1.bf16.msra.mxu0 0
        %1301 = vmatprep.subr.bf16.mxu0 0
        %1302 = vmatpush1.bf16.msra.mxu0 0
        %1303 = vmatprep.subr.bf16.mxu0 0
        %1304 = vmatpush1.bf16.msra.mxu0 0
        %1305 = vmatprep.subr.bf16.mxu0 0
        %1306 = vmatpush1.bf16.msra.mxu0 0
        %1307 = vmatprep.mubr.bf16.mxu0 0
        %1308 = vmatmul.mubr.bf16.gmra.mrb[0].mxu0 %v1210
        %v1309 = vpop.f32.mrb[0].mxu0
        %v1310 = vadd.f32 0.0, %v1309
        %v1311 = vpop.f32.mrb[0].mxu0
        %v1312 = vpop.f32.mrb[0].mxu0
        %v1313 = vpop.f32.mrb[0].mxu0
        %1314 = vdwg.mxu0
        %v1315 = vadd.f32 %v459, %v1310
        %v1316 = vld [vmem:[%s456] sm:$0x1]
        %v1318 = vlaneseq
        %v1319 = vshrl.u32 %v1318, 7
        %v1320 = vsub.s32 0, %v1319
        %v1321 = vrot.slane %v1316, %v1320
        %v1323 = vadd.f32 %v1315, %v1321
        %1324 = vst [vmem:[%s444] sm:$0xff] %v1323
        %s1325 = sand.u32 %s245, 1
        %s1326 = scalar_lea.sflag [#allocation6], %s1325
        %s1327 = sand.u32 %s245, 1
        %s1328 = smul.addr %s1327, 8
        %s1329 = scalar_lea.vmem [#allocation12], %s1328
        // Predicated region
        $region69: #{tpu_custom_call.1} parent=51 // pred_check
          %p1330 = pneg %p255
        $region70: #{tpu_custom_call.1} parent=51 // pred_check_branch
          %1332 = sbr.rel (%p1330) target = $region72
        $region71: #{tpu_custom_call.1} parent=51 // pred_region
          %s1334 = ssub.s32 128, 128
          %1335 = vsyncadd %s1326, %s1334
          %s1336 = smul.addr %s31, 128
          %s1337 = scalar_lea.hbm %s9, %s1336
          %s1339 = sshll.u32 %s1329, 4
          %s1340 = int_to_ptr.vmem [resolvable:$true] %s1339
          %1342 = dma.vmem_to_hbm [thread:$0]  %s1340, 128, %s1337, %s1326
        $region72: #{tpu_custom_call.1} parent=51 // pred_fallthru
          _
      $region52: #{tpu_custom_call.1} parent=5 // pred_fallthru
        _
      %p1343 = scmp.le.s32.totalorder 2, %s26
      // Predicated region
      $region73: #{tpu_custom_call.1} parent=5 // pred_check
        %p1344 = pneg %p1343
      $region74: #{tpu_custom_call.1} parent=5 // pred_check_branch
        %1346 = sbr.rel (%p1344) target = $region76
      $region75: #{tpu_custom_call.1} parent=5 // pred_region
        %s1347 = ssub.s32 %s26, 2
        // Predicated region
        $region77: #{tpu_custom_call.1} parent=75 // pred_check
          %p1348 = pneg %p261
        $region78: #{tpu_custom_call.1} parent=75 // pred_check_branch
          %1350 = sbr.rel (%p1348) target = $region80
        $region79: #{tpu_custom_call.1} parent=75 // pred_region
          %s1351 = sand.u32 %s246, 1
          %s1352 = scalar_lea.sflag [#allocation6], %s1351
          %s1353 = sand.u32 %s246, 1
          %s1354 = smul.addr %s1353, 8
          %s1355 = scalar_lea.vmem [#allocation12], %s1354
          %1356 = dma.done %s1352, 128
        $region80: #{tpu_custom_call.1} parent=75 // pred_fallthru
          _
      $region76: #{tpu_custom_call.1} parent=5 // pred_fallthru
        _
    $region6: #{tpu_custom_call.1} parent=1 // loop_footer
      %s30 = sadd.s32 1, %s26
    $region7: #{tpu_custom_call.1} parent=1 // loop_footer_branch
      %25 = sbr.rel target = $region3
    $region8: #{tpu_custom_call.1} parent=1 // loop_exit
      _
    %1357 = vsyncpa [#allocation5], 1
    %s1358 = scalar_lea.sflag [#allocation5], 1
    %1359 = vsyncpa %s1358, 1
    %1360 = vsyncpa [#allocation8], 1
    %s1361 = scalar_lea.sflag [#allocation8], 1
    %1362 = vsyncpa %s1361, 1
    %1363 = vsyncpa [#allocation11], 1
    %1364 = vsyncpa [#allocation6], 1
    %s1365 = scalar_lea.sflag [#allocation6], 1
    %1366 = vsyncpa %s1365, 1

</llo_original>
